<compile_context>
chip_gen: v7x
topology: tpu7x:2x2x1
jax: 0.10.0
libtpu: 0.0.40
codegen_flags: <defaults>
</compile_context>

<pallas_src>
import functools
import math

import jax
import jax.numpy as jnp
from jax.experimental import pallas as pl
from jax.experimental.pallas import tpu as pltpu


# ------------------------- tile helper -------------------------

def _pick_tile(dim, target, align):
    """Largest legal block size <= target.

    block == full dim is always legal; otherwise pick the largest multiple of
    `align` that divides `dim` (keeps (8,128) alignment rules satisfied),
    falling back to the full dim."""
    if dim <= target:
        return dim
    t = (target // align) * align
    while t >= align:
        if dim % t == 0:
            return t
        t -= align
    return dim


# ------------------------- QKV projection -------------------------

def _qkv_proj_kernel(x_ref, wq_ref, wk_ref, wv_ref, bq_ref, bk_ref, bv_ref,
                     q_out, k_out, v_out, acc_q, acc_k, acc_v):
    ki = pl.program_id(2)

    @pl.when(ki == 0)
    def _():
        acc_q[...] = jnp.zeros_like(acc_q)
        acc_k[...] = jnp.zeros_like(acc_k)
        acc_v[...] = jnp.zeros_like(acc_v)

    x = x_ref[...]
    nt = (((1,), (1,)), ((), ()))     # contract x's K with w's K (w is [N, K])
    acc_q[...] += jax.lax.dot_general(x, wq_ref[...], nt,
                                      preferred_element_type=jnp.float32)
    acc_k[...] += jax.lax.dot_general(x, wk_ref[...], nt,
                                      preferred_element_type=jnp.float32)
    acc_v[...] += jax.lax.dot_general(x, wv_ref[...], nt,
                                      preferred_element_type=jnp.float32)

    @pl.when(ki == pl.num_programs(2) - 1)
    def _():
        q_out[...] = (acc_q[...] + bq_ref[...]).astype(q_out.dtype)
        k_out[...] = (acc_k[...] + bk_ref[...]).astype(k_out.dtype)
        v_out[...] = (acc_v[...] + bv_ref[...]).astype(v_out.dtype)


def qkv_projection(x2, qkvw, bq, bk, bv, attn_size):
    """x2: [M, H]; qkvw: [3A, H] (native); bq/bk/bv: [1, A] -> 3 x [M, A]."""
    M, H = x2.shape
    A = attn_size
    tm = _pick_tile(M, 256, 8)
    tn = _pick_tile(A, 256, 128)
    tk = _pick_tile(H, 512, 128)
    nb = A // tn                          # N-blocks per Q/K/V output

    def w_spec(off):
        return pl.BlockSpec((tn, tk), lambda m, n, k, off=off: (off + n, k))

    out_sds = jax.ShapeDtypeStruct((M, A), x2.dtype)
    return pl.pallas_call(
        _qkv_proj_kernel,
        out_shape=(out_sds, out_sds, out_sds),
        grid=(M // tm, nb, H // tk),
        in_specs=[
            pl.BlockSpec((tm, tk), lambda m, n, k: (m, k)),
            w_spec(0), w_spec(nb), w_spec(2 * nb),     # Q / K / V row blocks
            pl.BlockSpec((1, tn), lambda m, n, k: (0, n)),
            pl.BlockSpec((1, tn), lambda m, n, k: (0, n)),
            pl.BlockSpec((1, tn), lambda m, n, k: (0, n)),
        ],
        out_specs=(
            pl.BlockSpec((tm, tn), lambda m, n, k: (m, n)),
            pl.BlockSpec((tm, tn), lambda m, n, k: (m, n)),
            pl.BlockSpec((tm, tn), lambda m, n, k: (m, n)),
        ),
        scratch_shapes=[pltpu.VMEM((tm, tn), jnp.float32)] * 3,
        compiler_params=pltpu.CompilerParams(
            dimension_semantics=("parallel", "parallel", "arbitrary")),
    )(x2, qkvw, qkvw, qkvw, bq, bk, bv)


# ------------------------- output projection -------------------------

def _linear_nt_kernel(x_ref, w_ref, b_ref, o_ref, acc_ref):
    ki = pl.program_id(2)

    @pl.when(ki == 0)
    def _():
        acc_ref[...] = jnp.zeros_like(acc_ref)

    acc_ref[...] += jax.lax.dot_general(
        x_ref[...], w_ref[...], (((1,), (1,)), ((), ())),
        preferred_element_type=jnp.float32)

    @pl.when(ki == pl.num_programs(2) - 1)
    def _():
        o_ref[...] = (acc_ref[...] + b_ref[...]).astype(o_ref.dtype)


def output_projection(x2, ow, ob):
    """x2: [M, A]; ow: [H, A] (native); ob: [1, H] -> [M, H]."""
    M, A = x2.shape
    H = ow.shape[0]
    tm = _pick_tile(M, 256, 8)
    tn = _pick_tile(H, 256, 128)
    tk = _pick_tile(A, 512, 128)
    return pl.pallas_call(
        _linear_nt_kernel,
        out_shape=jax.ShapeDtypeStruct((M, H), x2.dtype),
        grid=(M // tm, H // tn, A // tk),
        in_specs=[
            pl.BlockSpec((tm, tk), lambda m, n, k: (m, k)),
            pl.BlockSpec((tn, tk), lambda m, n, k: (n, k)),
            pl.BlockSpec((1, tn), lambda m, n, k: (0, n)),
        ],
        out_specs=pl.BlockSpec((tm, tn), lambda m, n, k: (m, n)),
        scratch_shapes=[pltpu.VMEM((tm, tn), jnp.float32)],
        compiler_params=pltpu.CompilerParams(
            dimension_semantics=("parallel", "parallel", "arbitrary")),
    )(x2, ow, ob)


# ------------------------- flash attention -------------------------

def _flash_attn_kernel(q_ref, k_ref, v_ref, mask_ref, o_ref,
                       m_sc, l_sc, acc_sc, *, heads, head_dim, scale):
    ki = pl.program_id(2)

    @pl.when(ki == 0)
    def _():
        m_sc[...] = jnp.full(m_sc.shape, -jnp.inf, m_sc.dtype)
        l_sc[...] = jnp.zeros(l_sc.shape, l_sc.dtype)
        acc_sc[...] = jnp.zeros(acc_sc.shape, acc_sc.dtype)

    q = q_ref[0] * scale          # (tq, A); fold 1/sqrt(D) into Q once
    kt = k_ref[0]                 # (tkv, A)
    vt = v_ref[0]                 # (tkv, A)
    mask = mask_ref[0, 0]         # (1, tkv) additive key mask

    # Static unroll over heads (heads never mix inside a matmul).
    for h in range(heads):
        lo, hi = h * head_dim, (h + 1) * head_dim
        qh, kh, vh = q[:, lo:hi], kt[:, lo:hi], vt[:, lo:hi]

        s = jax.lax.dot_general(qh, kh, (((1,), (1,)), ((), ())),
                                preferred_element_type=jnp.float32)
        s = s + mask                                            # (tq, tkv)

        m_prev = m_sc[h]                                        # (tq, 1)
        m_new = jnp.maximum(m_prev, jnp.max(s, axis=-1, keepdims=True))
        alpha = jnp.exp(m_prev - m_new)
        p = jnp.exp(s - m_new)
        l_sc[h] = alpha * l_sc[h] + jnp.sum(p, axis=-1, keepdims=True)
        acc_sc[h] = alpha * acc_sc[h] + jnp.dot(
            p.astype(vh.dtype), vh, preferred_element_type=jnp.float32)
        m_sc[h] = m_new

    @pl.when(ki == pl.num_programs(2) - 1)
    def _():
        ctx = [acc_sc[h] * pl.reciprocal(l_sc[h], approx=True)
               for h in range(heads)]
        # single lane-dense (tq, A) store of the merged-head context
        o_ref[0] = jnp.concatenate(ctx, axis=-1).astype(o_ref.dtype)


def flash_attention(q, k, v, mask, *, heads, scale):
    """q,k,v: [B, S, A] (merged heads); mask: [B, 1, 1, S] -> [B, S, A]."""
    B, S, A = q.shape
    D = A // heads
    tq = _pick_tile(S, 256, 8)
    tkv = _pick_tile(S, 256, 128)   # mask's last-dim block: 128-aligned or full
    kern = functools.partial(_flash_attn_kernel,
                             heads=heads, head_dim=D, scale=scale)
    return pl.pallas_call(
        kern,
        out_shape=jax.ShapeDtypeStruct((B, S, A), q.dtype),
        grid=(B, S // tq, S // tkv),
        in_specs=[
            pl.BlockSpec((1, tq, A), lambda b, qi, ki: (b, qi, 0)),
            pl.BlockSpec((1, tkv, A), lambda b, qi, ki: (b, ki, 0)),
            pl.BlockSpec((1, tkv, A), lambda b, qi, ki: (b, ki, 0)),
            pl.BlockSpec((1, 1, 1, tkv), lambda b, qi, ki: (b, 0, 0, ki)),
        ],
        out_specs=pl.BlockSpec((1, tq, A), lambda b, qi, ki: (b, qi, 0)),
        scratch_shapes=[
            pltpu.VMEM((heads, tq, 1), jnp.float32),   # running max
            pltpu.VMEM((heads, tq, 1), jnp.float32),   # running sum
            pltpu.VMEM((heads, tq, D), jnp.float32),   # context accumulator
        ],
        compiler_params=pltpu.CompilerParams(
            dimension_semantics=("parallel", "parallel", "arbitrary")),
    )(q, k, v, mask)


# ------------------------- forward wrapper -------------------------

def deepspeed_self_attention_forward(x, input_mask,
                                     attn_qkvw, attn_qkvb, attn_ow, attn_ob,
                                     heads):
    B, S, H = x.shape
    A = attn_qkvw.shape[0] // 3            # selfattention_size
    D = A // heads
    scale = 1.0 / math.sqrt(D)

    x2 = x.reshape(B * S, H)               # contiguous reshape (free)
    bq = attn_qkvb[0:A].reshape(1, A)      # tiny bias slices (negligible)
    bk = attn_qkvb[A:2 * A].reshape(1, A)
    bv = attn_qkvb[2 * A:3 * A].reshape(1, A)

    # QKV projection -> three merged-head [B*S, A] arrays (no transposes)
    q2, k2, v2 = qkv_projection(x2, attn_qkvw, bq, bk, bv, A)
    q = q2.reshape(B, S, A)
    k = k2.reshape(B, S, A)
    v = v2.reshape(B, S, A)

    # flash attention with additive mask, lane-dense [B, S, A] output
    ctx = flash_attention(q, k, v, input_mask, heads=heads, scale=scale)

    # output projection (attn_ow kept in native [H, A] layout)
    out = output_projection(ctx.reshape(B * S, A), attn_ow,
                            attn_ob.reshape(1, H))
    return out.reshape(B, S, H)


# ------------------------- pure-JAX reference -------------------------

def _reference(x, input_mask, attn_qkvw, attn_qkvb, attn_ow, attn_ob, heads):
    B, S, H = x.shape
    A = attn_qkvw.shape[0] // 3
    D = A // heads
    qkv = x @ attn_qkvw.T + attn_qkvb
    qkv = qkv.reshape(B, S, 3, heads, D)
    q = jnp.transpose(qkv[:, :, 0], (0, 2, 1, 3))
    k = jnp.transpose(qkv[:, :, 1], (0, 2, 1, 3))
    v = jnp.transpose(qkv[:, :, 2], (0, 2, 1, 3))
    s = jnp.einsum('bhqd,bhkd->bhqk', q, k) / math.sqrt(D) + input_mask
    p = jax.nn.softmax(s, axis=-1)
    ctx = jnp.einsum('bhqk,bhkd->bhqd', p, v)
    ctx = jnp.transpose(ctx, (0, 2, 1, 3)).reshape(B, S, A)
    return ctx @ attn_ow.T + attn_ob


# ------------------------- main -------------------------

if __name__ == "__main__":
    # small config consistent with DeepSpeedTransformerConfig
    batch, seq, hidden = 2, 8, 32
    heads = 4
    attn_size = hidden                     # selfattention_size
    initializer_range = 0.02
    dtype = jnp.float32

    key = jax.random.PRNGKey(0)
    k_x, k_qkvw, k_ow, k_qkvb, k_ob = jax.random.split(key, 5)

    # parameters (module shapes; biases non-zero to exercise the bias path)
    attn_qkvw = initializer_range * jax.random.normal(
        k_qkvw, (attn_size * 3, hidden), dtype)
    attn_qkvb = 0.01 * jax.random.normal(k_qkvb, (attn_size * 3,), dtype)
    attn_ow = initializer_range * jax.random.normal(
        k_ow, (hidden, attn_size), dtype)
    attn_ob = 0.01 * jax.random.normal(k_ob, (hidden,), dtype)

    # inputs
    x = jax.random.normal(k_x, (batch, seq, hidden), dtype)
    # additive attention mask: mask out the last two keys of batch 1
    mask = jnp.zeros((batch, 1, 1, seq), dtype)
    mask = mask.at[1, :, :, -2:].set(-10000.0)

    fwd = jax.jit(functools.partial(deepspeed_self_attention_forward,
                                    heads=heads))
    out = jax.block_until_ready(
        fwd(x, mask, attn_qkvw, attn_qkvb, attn_ow, attn_ob))

    ref = _reference(x, mask, attn_qkvw, attn_qkvb, attn_ow, attn_ob, heads)
    assert out.shape == (batch, seq, hidden)
    # approx EUP reciprocal in the softmax finalize -> slightly relaxed tol
    assert jnp.allclose(out, ref, atol=1e-4, rtol=1e-3), "mismatch vs reference"

    print("KERNEL_OK")
</pallas_src>

<mosaic_0001>
module attributes {stable_mosaic.version = 11 : i64} {
  func.func @_flash_attn_kernel(%arg0: i32, %arg1: i32, %arg2: i32, %arg3: memref<1x8x32xf32, #tpu.memory_space<vmem>>, %arg4: memref<1x8x32xf32, #tpu.memory_space<vmem>>, %arg5: memref<1x8x32xf32, #tpu.memory_space<vmem>>, %arg6: memref<1x1x1x8xf32, #tpu.memory_space<vmem>>, %arg7: memref<1x8x32xf32, #tpu.memory_space<vmem>>, %arg8: memref<4x8x1xf32, #tpu.memory_space<vmem>>, %arg9: memref<4x8x1xf32, #tpu.memory_space<vmem>>, %arg10: memref<4x8x8xf32, #tpu.memory_space<vmem>>) attributes {dimension_semantics = [#tpu.dimension_semantics<parallel>, #tpu.dimension_semantics<parallel>, #tpu.dimension_semantics<arbitrary>], iteration_bounds = array<i64: 2, 1, 1>, scalar_prefetch = 0 : i64, scratch_operands = 3 : i64, tpu.core_type = #tpu.core_type<tc>, window_params = [{transform_indices = @transform_0, window_bounds = array<i64: 1, 8, 32>}, {transform_indices = @transform_1, window_bounds = array<i64: 1, 8, 32>}, {transform_indices = @transform_2, window_bounds = array<i64: 1, 8, 32>}, {transform_indices = @transform_3, window_bounds = array<i64: 1, 1, 1, 8>}, {transform_indices = @transform_4, window_bounds = array<i64: 1, 8, 32>}]} {
    %c0_i32 = arith.constant 0 : i32
    %0 = arith.cmpi eq, %arg2, %c0_i32 : i32
    %1 = arith.extui %0 : i1 to i32
    %c0_i32_0 = arith.constant 0 : i32
    %2 = arith.cmpi ne, %1, %c0_i32_0 : i32
    scf.if %2 {
      %cst_100 = arith.constant 0xFF800000 : f32
      %164 = vector.broadcast %cst_100 : f32 to vector<4x8x1xf32>
      %c0_101 = arith.constant 0 : index
      %c0_102 = arith.constant 0 : index
      %c0_103 = arith.constant 0 : index
      %165 = vector.load %arg8[%c0_101, %c0_102, %c0_103] : memref<4x8x1xf32, #tpu.memory_space<vmem>>, vector<4x8x1xf32>
      tpu.vector_store %arg8[%c0_101, %c0_102, %c0_103], %164 {strides = array<i32>} : memref<4x8x1xf32, #tpu.memory_space<vmem>>, vector<4x8x1xf32>,
      %cst_104 = arith.constant 0.000000e+00 : f32
      %166 = vector.broadcast %cst_104 : f32 to vector<4x8x1xf32>
      %c0_105 = arith.constant 0 : index
      %c0_106 = arith.constant 0 : index
      %c0_107 = arith.constant 0 : index
      %167 = vector.load %arg9[%c0_105, %c0_106, %c0_107] : memref<4x8x1xf32, #tpu.memory_space<vmem>>, vector<4x8x1xf32>
      tpu.vector_store %arg9[%c0_105, %c0_106, %c0_107], %166 {strides = array<i32>} : memref<4x8x1xf32, #tpu.memory_space<vmem>>, vector<4x8x1xf32>,
      %cst_108 = arith.constant 0.000000e+00 : f32
      %168 = vector.broadcast %cst_108 : f32 to vector<4x8x8xf32>
      %c0_109 = arith.constant 0 : index
      %c0_110 = arith.constant 0 : index
      %c0_111 = arith.constant 0 : index
      %169 = vector.load %arg10[%c0_109, %c0_110, %c0_111] : memref<4x8x8xf32, #tpu.memory_space<vmem>>, vector<4x8x8xf32>
      tpu.vector_store %arg10[%c0_109, %c0_110, %c0_111], %168 {strides = array<i32>} : memref<4x8x8xf32, #tpu.memory_space<vmem>>, vector<4x8x8xf32>,
    } else {
    }
    %c0 = arith.constant 0 : index
    %c0_1 = arith.constant 0 : index
    %c0_2 = arith.constant 0 : index
    %3 = vector.load %arg3[%c0, %c0_1, %c0_2] : memref<1x8x32xf32, #tpu.memory_space<vmem>>, vector<1x8x32xf32>
    %4 = vector.shape_cast %3 : vector<1x8x32xf32> to vector<8x32xf32>
    %cst = arith.constant 0.353553385 : f32
    %5 = vector.broadcast %cst : f32 to vector<8x32xf32>
    %6 = arith.mulf %4, %5 : vector<8x32xf32>
    %c0_3 = arith.constant 0 : index
    %c0_4 = arith.constant 0 : index
    %c0_5 = arith.constant 0 : index
    %7 = vector.load %arg4[%c0_3, %c0_4, %c0_5] : memref<1x8x32xf32, #tpu.memory_space<vmem>>, vector<1x8x32xf32>
    %8 = vector.shape_cast %7 : vector<1x8x32xf32> to vector<8x32xf32>
    %c0_6 = arith.constant 0 : index
    %c0_7 = arith.constant 0 : index
    %c0_8 = arith.constant 0 : index
    %9 = vector.load %arg5[%c0_6, %c0_7, %c0_8] : memref<1x8x32xf32, #tpu.memory_space<vmem>>, vector<1x8x32xf32>
    %10 = vector.shape_cast %9 : vector<1x8x32xf32> to vector<8x32xf32>
    %c0_9 = arith.constant 0 : index
    %c0_10 = arith.constant 0 : index
    %c0_11 = arith.constant 0 : index
    %c0_12 = arith.constant 0 : index
    %11 = vector.load %arg6[%c0_9, %c0_10, %c0_11, %c0_12] : memref<1x1x1x8xf32, #tpu.memory_space<vmem>>, vector<1x1x1x8xf32>
    %12 = vector.shape_cast %11 : vector<1x1x1x8xf32> to vector<1x8xf32>
    %13 = vector.extract_strided_slice %6 {offsets = [0, 0], sizes = [8, 8], strides = [1, 1]} : vector<8x32xf32> to vector<8x8xf32>
    %14 = vector.extract_strided_slice %8 {offsets = [0, 0], sizes = [8, 8], strides = [1, 1]} : vector<8x32xf32> to vector<8x8xf32>
    %15 = vector.extract_strided_slice %10 {offsets = [0, 0], sizes = [8, 8], strides = [1, 1]} : vector<8x32xf32> to vector<8x8xf32>
    %cst_13 = arith.constant dense<0.000000e+00> : vector<8x8xf32>
    %16 = tpu.matmul %13, %14, %cst_13 {dimension_numbers = #tpu.dot_dimension_numbers<[1], [1], [0], [0], [0, 0, 1, 0], [], []>} : vector<8x8xf32>, vector<8x8xf32>, vector<8x8xf32> -> vector<8x8xf32>
    %17 = vector.broadcast %12 : vector<1x8xf32> to vector<8x8xf32>
    %18 = arith.addf %16, %17 : vector<8x8xf32>
    %c0_14 = arith.constant 0 : index
    %c0_15 = arith.constant 0 : index
    %c0_16 = arith.constant 0 : index
    %19 = vector.load %arg8[%c0_14, %c0_15, %c0_16] : memref<4x8x1xf32, #tpu.memory_space<vmem>>, vector<1x8x1xf32>
    %20 = vector.shape_cast %19 : vector<1x8x1xf32> to vector<8x1xf32>
    %cst_17 = arith.constant dense<0xFF800000> : vector<8xf32>
    %21 = vector.multi_reduction <maximumf>, %18, %cst_17 [1] : vector<8x8xf32> to vector<8xf32>
    %22 = vector.shape_cast %21 : vector<8xf32> to vector<8x1xf32>
    %23 = arith.maximumf %20, %22 : vector<8x1xf32>
    %24 = arith.subf %20, %23 : vector<8x1xf32>
    %25 = math.exp %24 : vector<8x1xf32>
    %26 = vector.broadcast %23 : vector<8x1xf32> to vector<8x8xf32>
    %27 = arith.subf %18, %26 : vector<8x8xf32>
    %28 = math.exp %27 : vector<8x8xf32>
    %c0_18 = arith.constant 0 : index
    %c0_19 = arith.constant 0 : index
    %c0_20 = arith.constant 0 : index
    %29 = vector.load %arg9[%c0_18, %c0_19, %c0_20] : memref<4x8x1xf32, #tpu.memory_space<vmem>>, vector<1x8x1xf32>
    %30 = vector.shape_cast %29 : vector<1x8x1xf32> to vector<8x1xf32>
    %31 = arith.mulf %25, %30 : vector<8x1xf32>
    %cst_21 = arith.constant dense<0.000000e+00> : vector<8xf32>
    %32 = vector.multi_reduction <add>, %28, %cst_21 [1] : vector<8x8xf32> to vector<8xf32>
    %33 = vector.shape_cast %32 : vector<8xf32> to vector<8x1xf32>
    %34 = arith.addf %31, %33 : vector<8x1xf32>
    %c0_22 = arith.constant 0 : index
    %c0_23 = arith.constant 0 : index
    %c0_24 = arith.constant 0 : index
    %35 = vector.load %arg9[%c0_22, %c0_23, %c0_24] : memref<4x8x1xf32, #tpu.memory_space<vmem>>, vector<1x8x1xf32>
    %36 = vector.shape_cast %35 : vector<1x8x1xf32> to vector<8x1xf32>
    %37 = vector.shape_cast %34 : vector<8x1xf32> to vector<1x8x1xf32>
    tpu.vector_store %arg9[%c0_22, %c0_23, %c0_24], %37 {strides = array<i32>} : memref<4x8x1xf32, #tpu.memory_space<vmem>>, vector<1x8x1xf32>,
    %c0_25 = arith.constant 0 : index
    %c0_26 = arith.constant 0 : index
    %c0_27 = arith.constant 0 : index
    %38 = vector.load %arg10[%c0_25, %c0_26, %c0_27] : memref<4x8x8xf32, #tpu.memory_space<vmem>>, vector<1x8x8xf32>
    %39 = vector.shape_cast %38 : vector<1x8x8xf32> to vector<8x8xf32>
    %40 = vector.broadcast %25 : vector<8x1xf32> to vector<8x8xf32>
    %41 = arith.mulf %40, %39 : vector<8x8xf32>
    %cst_28 = arith.constant dense<0.000000e+00> : vector<8x8xf32>
    %42 = tpu.matmul %28, %15, %cst_28 {dimension_numbers = #tpu.dot_dimension_numbers<[1], [0], [0], [1], [0, 0, 1, 1], [], []>} : vector<8x8xf32>, vector<8x8xf32>, vector<8x8xf32> -> vector<8x8xf32>
    %43 = arith.addf %41, %42 : vector<8x8xf32>
    %c0_29 = arith.constant 0 : index
    %c0_30 = arith.constant 0 : index
    %c0_31 = arith.constant 0 : index
    %44 = vector.load %arg10[%c0_29, %c0_30, %c0_31] : memref<4x8x8xf32, #tpu.memory_space<vmem>>, vector<1x8x8xf32>
    %45 = vector.shape_cast %44 : vector<1x8x8xf32> to vector<8x8xf32>
    %46 = vector.shape_cast %43 : vector<8x8xf32> to vector<1x8x8xf32>
    tpu.vector_store %arg10[%c0_29, %c0_30, %c0_31], %46 {strides = array<i32>} : memref<4x8x8xf32, #tpu.memory_space<vmem>>, vector<1x8x8xf32>,
    %c0_32 = arith.constant 0 : index
    %c0_33 = arith.constant 0 : index
    %c0_34 = arith.constant 0 : index
    %47 = vector.load %arg8[%c0_32, %c0_33, %c0_34] : memref<4x8x1xf32, #tpu.memory_space<vmem>>, vector<1x8x1xf32>
    %48 = vector.shape_cast %47 : vector<1x8x1xf32> to vector<8x1xf32>
    %49 = vector.shape_cast %23 : vector<8x1xf32> to vector<1x8x1xf32>
    tpu.vector_store %arg8[%c0_32, %c0_33, %c0_34], %49 {strides = array<i32>} : memref<4x8x1xf32, #tpu.memory_space<vmem>>, vector<1x8x1xf32>,
    %50 = vector.extract_strided_slice %6 {offsets = [0, 8], sizes = [8, 8], strides = [1, 1]} : vector<8x32xf32> to vector<8x8xf32>
    %51 = vector.extract_strided_slice %8 {offsets = [0, 8], sizes = [8, 8], strides = [1, 1]} : vector<8x32xf32> to vector<8x8xf32>
    %52 = vector.extract_strided_slice %10 {offsets = [0, 8], sizes = [8, 8], strides = [1, 1]} : vector<8x32xf32> to vector<8x8xf32>
    %cst_35 = arith.constant dense<0.000000e+00> : vector<8x8xf32>
    %53 = tpu.matmul %50, %51, %cst_35 {dimension_numbers = #tpu.dot_dimension_numbers<[1], [1], [0], [0], [0, 0, 1, 0], [], []>} : vector<8x8xf32>, vector<8x8xf32>, vector<8x8xf32> -> vector<8x8xf32>
    %54 = vector.broadcast %12 : vector<1x8xf32> to vector<8x8xf32>
    %55 = arith.addf %53, %54 : vector<8x8xf32>
    %c1 = arith.constant 1 : index
    %c0_36 = arith.constant 0 : index
    %c0_37 = arith.constant 0 : index
    %56 = vector.load %arg8[%c1, %c0_36, %c0_37] : memref<4x8x1xf32, #tpu.memory_space<vmem>>, vector<1x8x1xf32>
    %57 = vector.shape_cast %56 : vector<1x8x1xf32> to vector<8x1xf32>
    %cst_38 = arith.constant dense<0xFF800000> : vector<8xf32>
    %58 = vector.multi_reduction <maximumf>, %55, %cst_38 [1] : vector<8x8xf32> to vector<8xf32>
    %59 = vector.shape_cast %58 : vector<8xf32> to vector<8x1xf32>
    %60 = arith.maximumf %57, %59 : vector<8x1xf32>
    %61 = arith.subf %57, %60 : vector<8x1xf32>
    %62 = math.exp %61 : vector<8x1xf32>
    %63 = vector.broadcast %60 : vector<8x1xf32> to vector<8x8xf32>
    %64 = arith.subf %55, %63 : vector<8x8xf32>
    %65 = math.exp %64 : vector<8x8xf32>
    %c1_39 = arith.constant 1 : index
    %c0_40 = arith.constant 0 : index
    %c0_41 = arith.constant 0 : index
    %66 = vector.load %arg9[%c1_39, %c0_40, %c0_41] : memref<4x8x1xf32, #tpu.memory_space<vmem>>, vector<1x8x1xf32>
    %67 = vector.shape_cast %66 : vector<1x8x1xf32> to vector<8x1xf32>
    %68 = arith.mulf %62, %67 : vector<8x1xf32>
    %cst_42 = arith.constant dense<0.000000e+00> : vector<8xf32>
    %69 = vector.multi_reduction <add>, %65, %cst_42 [1] : vector<8x8xf32> to vector<8xf32>
    %70 = vector.shape_cast %69 : vector<8xf32> to vector<8x1xf32>
    %71 = arith.addf %68, %70 : vector<8x1xf32>
    %c1_43 = arith.constant 1 : index
    %c0_44 = arith.constant 0 : index
    %c0_45 = arith.constant 0 : index
    %72 = vector.load %arg9[%c1_43, %c0_44, %c0_45] : memref<4x8x1xf32, #tpu.memory_space<vmem>>, vector<1x8x1xf32>
    %73 = vector.shape_cast %72 : vector<1x8x1xf32> to vector<8x1xf32>
    %74 = vector.shape_cast %71 : vector<8x1xf32> to vector<1x8x1xf32>
    tpu.vector_store %arg9[%c1_43, %c0_44, %c0_45], %74 {strides = array<i32>} : memref<4x8x1xf32, #tpu.memory_space<vmem>>, vector<1x8x1xf32>,
    %c1_46 = arith.constant 1 : index
    %c0_47 = arith.constant 0 : index
    %c0_48 = arith.constant 0 : index
    %75 = vector.load %arg10[%c1_46, %c0_47, %c0_48] : memref<4x8x8xf32, #tpu.memory_space<vmem>>, vector<1x8x8xf32>
    %76 = vector.shape_cast %75 : vector<1x8x8xf32> to vector<8x8xf32>
    %77 = vector.broadcast %62 : vector<8x1xf32> to vector<8x8xf32>
    %78 = arith.mulf %77, %76 : vector<8x8xf32>
    %cst_49 = arith.constant dense<0.000000e+00> : vector<8x8xf32>
    %79 = tpu.matmul %65, %52, %cst_49 {dimension_numbers = #tpu.dot_dimension_numbers<[1], [0], [0], [1], [0, 0, 1, 1], [], []>} : vector<8x8xf32>, vector<8x8xf32>, vector<8x8xf32> -> vector<8x8xf32>
    %80 = arith.addf %78, %79 : vector<8x8xf32>
    %c1_50 = arith.constant 1 : index
    %c0_51 = arith.constant 0 : index
    %c0_52 = arith.constant 0 : index
    %81 = vector.load %arg10[%c1_50, %c0_51, %c0_52] : memref<4x8x8xf32, #tpu.memory_space<vmem>>, vector<1x8x8xf32>
    %82 = vector.shape_cast %81 : vector<1x8x8xf32> to vector<8x8xf32>
    %83 = vector.shape_cast %80 : vector<8x8xf32> to vector<1x8x8xf32>
    tpu.vector_store %arg10[%c1_50, %c0_51, %c0_52], %83 {strides = array<i32>} : memref<4x8x8xf32, #tpu.memory_space<vmem>>, vector<1x8x8xf32>,
    %c1_53 = arith.constant 1 : index
    %c0_54 = arith.constant 0 : index
    %c0_55 = arith.constant 0 : index
    %84 = vector.load %arg8[%c1_53, %c0_54, %c0_55] : memref<4x8x1xf32, #tpu.memory_space<vmem>>, vector<1x8x1xf32>
    %85 = vector.shape_cast %84 : vector<1x8x1xf32> to vector<8x1xf32>
    %86 = vector.shape_cast %60 : vector<8x1xf32> to vector<1x8x1xf32>
    tpu.vector_store %arg8[%c1_53, %c0_54, %c0_55], %86 {strides = array<i32>} : memref<4x8x1xf32, #tpu.memory_space<vmem>>, vector<1x8x1xf32>,
    %87 = vector.extract_strided_slice %6 {offsets = [0, 16], sizes = [8, 8], strides = [1, 1]} : vector<8x32xf32> to vector<8x8xf32>
    %88 = vector.extract_strided_slice %8 {offsets = [0, 16], sizes = [8, 8], strides = [1, 1]} : vector<8x32xf32> to vector<8x8xf32>
    %89 = vector.extract_strided_slice %10 {offsets = [0, 16], sizes = [8, 8], strides = [1, 1]} : vector<8x32xf32> to vector<8x8xf32>
    %cst_56 = arith.constant dense<0.000000e+00> : vector<8x8xf32>
    %90 = tpu.matmul %87, %88, %cst_56 {dimension_numbers = #tpu.dot_dimension_numbers<[1], [1], [0], [0], [0, 0, 1, 0], [], []>} : vector<8x8xf32>, vector<8x8xf32>, vector<8x8xf32> -> vector<8x8xf32>
    %91 = vector.broadcast %12 : vector<1x8xf32> to vector<8x8xf32>
    %92 = arith.addf %90, %91 : vector<8x8xf32>
    %c2 = arith.constant 2 : index
    %c0_57 = arith.constant 0 : index
    %c0_58 = arith.constant 0 : index
    %93 = vector.load %arg8[%c2, %c0_57, %c0_58] : memref<4x8x1xf32, #tpu.memory_space<vmem>>, vector<1x8x1xf32>
    %94 = vector.shape_cast %93 : vector<1x8x1xf32> to vector<8x1xf32>
    %cst_59 = arith.constant dense<0xFF800000> : vector<8xf32>
    %95 = vector.multi_reduction <maximumf>, %92, %cst_59 [1] : vector<8x8xf32> to vector<8xf32>
    %96 = vector.shape_cast %95 : vector<8xf32> to vector<8x1xf32>
    %97 = arith.maximumf %94, %96 : vector<8x1xf32>
    %98 = arith.subf %94, %97 : vector<8x1xf32>
    %99 = math.exp %98 : vector<8x1xf32>
    %100 = vector.broadcast %97 : vector<8x1xf32> to vector<8x8xf32>
    %101 = arith.subf %92, %100 : vector<8x8xf32>
    %102 = math.exp %101 : vector<8x8xf32>
    %c2_60 = arith.constant 2 : index
    %c0_61 = arith.constant 0 : index
    %c0_62 = arith.constant 0 : index
    %103 = vector.load %arg9[%c2_60, %c0_61, %c0_62] : memref<4x8x1xf32, #tpu.memory_space<vmem>>, vector<1x8x1xf32>
    %104 = vector.shape_cast %103 : vector<1x8x1xf32> to vector<8x1xf32>
    %105 = arith.mulf %99, %104 : vector<8x1xf32>
    %cst_63 = arith.constant dense<0.000000e+00> : vector<8xf32>
    %106 = vector.multi_reduction <add>, %102, %cst_63 [1] : vector<8x8xf32> to vector<8xf32>
    %107 = vector.shape_cast %106 : vector<8xf32> to vector<8x1xf32>
    %108 = arith.addf %105, %107 : vector<8x1xf32>
    %c2_64 = arith.constant 2 : index
    %c0_65 = arith.constant 0 : index
    %c0_66 = arith.constant 0 : index
    %109 = vector.load %arg9[%c2_64, %c0_65, %c0_66] : memref<4x8x1xf32, #tpu.memory_space<vmem>>, vector<1x8x1xf32>
    %110 = vector.shape_cast %109 : vector<1x8x1xf32> to vector<8x1xf32>
    %111 = vector.shape_cast %108 : vector<8x1xf32> to vector<1x8x1xf32>
    tpu.vector_store %arg9[%c2_64, %c0_65, %c0_66], %111 {strides = array<i32>} : memref<4x8x1xf32, #tpu.memory_space<vmem>>, vector<1x8x1xf32>,
    %c2_67 = arith.constant 2 : index
    %c0_68 = arith.constant 0 : index
    %c0_69 = arith.constant 0 : index
    %112 = vector.load %arg10[%c2_67, %c0_68, %c0_69] : memref<4x8x8xf32, #tpu.memory_space<vmem>>, vector<1x8x8xf32>
    %113 = vector.shape_cast %112 : vector<1x8x8xf32> to vector<8x8xf32>
    %114 = vector.broadcast %99 : vector<8x1xf32> to vector<8x8xf32>
    %115 = arith.mulf %114, %113 : vector<8x8xf32>
    %cst_70 = arith.constant dense<0.000000e+00> : vector<8x8xf32>
    %116 = tpu.matmul %102, %89, %cst_70 {dimension_numbers = #tpu.dot_dimension_numbers<[1], [0], [0], [1], [0, 0, 1, 1], [], []>} : vector<8x8xf32>, vector<8x8xf32>, vector<8x8xf32> -> vector<8x8xf32>
    %117 = arith.addf %115, %116 : vector<8x8xf32>
    %c2_71 = arith.constant 2 : index
    %c0_72 = arith.constant 0 : index
    %c0_73 = arith.constant 0 : index
    %118 = vector.load %arg10[%c2_71, %c0_72, %c0_73] : memref<4x8x8xf32, #tpu.memory_space<vmem>>, vector<1x8x8xf32>
    %119 = vector.shape_cast %118 : vector<1x8x8xf32> to vector<8x8xf32>
    %120 = vector.shape_cast %117 : vector<8x8xf32> to vector<1x8x8xf32>
    tpu.vector_store %arg10[%c2_71, %c0_72, %c0_73], %120 {strides = array<i32>} : memref<4x8x8xf32, #tpu.memory_space<vmem>>, vector<1x8x8xf32>,
    %c2_74 = arith.constant 2 : index
    %c0_75 = arith.constant 0 : index
    %c0_76 = arith.constant 0 : index
    %121 = vector.load %arg8[%c2_74, %c0_75, %c0_76] : memref<4x8x1xf32, #tpu.memory_space<vmem>>, vector<1x8x1xf32>
    %122 = vector.shape_cast %121 : vector<1x8x1xf32> to vector<8x1xf32>
    %123 = vector.shape_cast %97 : vector<8x1xf32> to vector<1x8x1xf32>
    tpu.vector_store %arg8[%c2_74, %c0_75, %c0_76], %123 {strides = array<i32>} : memref<4x8x1xf32, #tpu.memory_space<vmem>>, vector<1x8x1xf32>,
    %124 = vector.extract_strided_slice %6 {offsets = [0, 24], sizes = [8, 8], strides = [1, 1]} : vector<8x32xf32> to vector<8x8xf32>
    %125 = vector.extract_strided_slice %8 {offsets = [0, 24], sizes = [8, 8], strides = [1, 1]} : vector<8x32xf32> to vector<8x8xf32>
    %126 = vector.extract_strided_slice %10 {offsets = [0, 24], sizes = [8, 8], strides = [1, 1]} : vector<8x32xf32> to vector<8x8xf32>
    %cst_77 = arith.constant dense<0.000000e+00> : vector<8x8xf32>
    %127 = tpu.matmul %124, %125, %cst_77 {dimension_numbers = #tpu.dot_dimension_numbers<[1], [1], [0], [0], [0, 0, 1, 0], [], []>} : vector<8x8xf32>, vector<8x8xf32>, vector<8x8xf32> -> vector<8x8xf32>
    %128 = vector.broadcast %12 : vector<1x8xf32> to vector<8x8xf32>
    %129 = arith.addf %127, %128 : vector<8x8xf32>
    %c3 = arith.constant 3 : index
    %c0_78 = arith.constant 0 : index
    %c0_79 = arith.constant 0 : index
    %130 = vector.load %arg8[%c3, %c0_78, %c0_79] : memref<4x8x1xf32, #tpu.memory_space<vmem>>, vector<1x8x1xf32>
    %131 = vector.shape_cast %130 : vector<1x8x1xf32> to vector<8x1xf32>
    %cst_80 = arith.constant dense<0xFF800000> : vector<8xf32>
    %132 = vector.multi_reduction <maximumf>, %129, %cst_80 [1] : vector<8x8xf32> to vector<8xf32>
    %133 = vector.shape_cast %132 : vector<8xf32> to vector<8x1xf32>
    %134 = arith.maximumf %131, %133 : vector<8x1xf32>
    %135 = arith.subf %131, %134 : vector<8x1xf32>
    %136 = math.exp %135 : vector<8x1xf32>
    %137 = vector.broadcast %134 : vector<8x1xf32> to vector<8x8xf32>
    %138 = arith.subf %129, %137 : vector<8x8xf32>
    %139 = math.exp %138 : vector<8x8xf32>
    %c3_81 = arith.constant 3 : index
    %c0_82 = arith.constant 0 : index
    %c0_83 = arith.constant 0 : index
    %140 = vector.load %arg9[%c3_81, %c0_82, %c0_83] : memref<4x8x1xf32, #tpu.memory_space<vmem>>, vector<1x8x1xf32>
    %141 = vector.shape_cast %140 : vector<1x8x1xf32> to vector<8x1xf32>
    %142 = arith.mulf %136, %141 : vector<8x1xf32>
    %cst_84 = arith.constant dense<0.000000e+00> : vector<8xf32>
    %143 = vector.multi_reduction <add>, %139, %cst_84 [1] : vector<8x8xf32> to vector<8xf32>
    %144 = vector.shape_cast %143 : vector<8xf32> to vector<8x1xf32>
    %145 = arith.addf %142, %144 : vector<8x1xf32>
    %c3_85 = arith.constant 3 : index
    %c0_86 = arith.constant 0 : index
    %c0_87 = arith.constant 0 : index
    %146 = vector.load %arg9[%c3_85, %c0_86, %c0_87] : memref<4x8x1xf32, #tpu.memory_space<vmem>>, vector<1x8x1xf32>
    %147 = vector.shape_cast %146 : vector<1x8x1xf32> to vector<8x1xf32>
    %148 = vector.shape_cast %145 : vector<8x1xf32> to vector<1x8x1xf32>
    tpu.vector_store %arg9[%c3_85, %c0_86, %c0_87], %148 {strides = array<i32>} : memref<4x8x1xf32, #tpu.memory_space<vmem>>, vector<1x8x1xf32>,
    %c3_88 = arith.constant 3 : index
    %c0_89 = arith.constant 0 : index
    %c0_90 = arith.constant 0 : index
    %149 = vector.load %arg10[%c3_88, %c0_89, %c0_90] : memref<4x8x8xf32, #tpu.memory_space<vmem>>, vector<1x8x8xf32>
    %150 = vector.shape_cast %149 : vector<1x8x8xf32> to vector<8x8xf32>
    %151 = vector.broadcast %136 : vector<8x1xf32> to vector<8x8xf32>
    %152 = arith.mulf %151, %150 : vector<8x8xf32>
    %cst_91 = arith.constant dense<0.000000e+00> : vector<8x8xf32>
    %153 = tpu.matmul %139, %126, %cst_91 {dimension_numbers = #tpu.dot_dimension_numbers<[1], [0], [0], [1], [0, 0, 1, 1], [], []>} : vector<8x8xf32>, vector<8x8xf32>, vector<8x8xf32> -> vector<8x8xf32>
    %154 = arith.addf %152, %153 : vector<8x8xf32>
    %c3_92 = arith.constant 3 : index
    %c0_93 = arith.constant 0 : index
    %c0_94 = arith.constant 0 : index
    %155 = vector.load %arg10[%c3_92, %c0_93, %c0_94] : memref<4x8x8xf32, #tpu.memory_space<vmem>>, vector<1x8x8xf32>
    %156 = vector.shape_cast %155 : vector<1x8x8xf32> to vector<8x8xf32>
    %157 = vector.shape_cast %154 : vector<8x8xf32> to vector<1x8x8xf32>
    tpu.vector_store %arg10[%c3_92, %c0_93, %c0_94], %157 {strides = array<i32>} : memref<4x8x8xf32, #tpu.memory_space<vmem>>, vector<1x8x8xf32>,
    %c3_95 = arith.constant 3 : index
    %c0_96 = arith.constant 0 : index
    %c0_97 = arith.constant 0 : index
    %158 = vector.load %arg8[%c3_95, %c0_96, %c0_97] : memref<4x8x1xf32, #tpu.memory_space<vmem>>, vector<1x8x1xf32>
    %159 = vector.shape_cast %158 : vector<1x8x1xf32> to vector<8x1xf32>
    %160 = vector.shape_cast %134 : vector<8x1xf32> to vector<1x8x1xf32>
    tpu.vector_store %arg8[%c3_95, %c0_96, %c0_97], %160 {strides = array<i32>} : memref<4x8x1xf32, #tpu.memory_space<vmem>>, vector<1x8x1xf32>,
    %c0_i32_98 = arith.constant 0 : i32
    %161 = arith.cmpi eq, %arg2, %c0_i32_98 : i32
    %162 = arith.extui %161 : i1 to i32
    %c0_i32_99 = arith.constant 0 : i32
    %163 = arith.cmpi ne, %162, %c0_i32_99 : i32
    scf.if %163 {
      %c0_100 = arith.constant 0 : index
      %c0_101 = arith.constant 0 : index
      %c0_102 = arith.constant 0 : index
      %164 = vector.load %arg10[%c0_100, %c0_101, %c0_102] : memref<4x8x8xf32, #tpu.memory_space<vmem>>, vector<1x8x8xf32>
      %165 = vector.shape_cast %164 : vector<1x8x8xf32> to vector<8x8xf32>
      %c0_103 = arith.constant 0 : index
      %c0_104 = arith.constant 0 : index
      %c0_105 = arith.constant 0 : index
      %166 = vector.load %arg9[%c0_103, %c0_104, %c0_105] : memref<4x8x1xf32, #tpu.memory_space<vmem>>, vector<1x8x1xf32>
      %167 = vector.shape_cast %166 : vector<1x8x1xf32> to vector<8x1xf32>
      %168 = tpu.reciprocal %167 {approx = true} : vector<8x1xf32> -> vector<8x1xf32>
      %169 = vector.broadcast %168 : vector<8x1xf32> to vector<8x8xf32>
      %170 = arith.mulf %165, %169 : vector<8x8xf32>
      %c1_106 = arith.constant 1 : index
      %c0_107 = arith.constant 0 : index
      %c0_108 = arith.constant 0 : index
      %171 = vector.load %arg10[%c1_106, %c0_107, %c0_108] : memref<4x8x8xf32, #tpu.memory_space<vmem>>, vector<1x8x8xf32>
      %172 = vector.shape_cast %171 : vector<1x8x8xf32> to vector<8x8xf32>
      %c1_109 = arith.constant 1 : index
      %c0_110 = arith.constant 0 : index
      %c0_111 = arith.constant 0 : index
      %173 = vector.load %arg9[%c1_109, %c0_110, %c0_111] : memref<4x8x1xf32, #tpu.memory_space<vmem>>, vector<1x8x1xf32>
      %174 = vector.shape_cast %173 : vector<1x8x1xf32> to vector<8x1xf32>
      %175 = tpu.reciprocal %174 {approx = true} : vector<8x1xf32> -> vector<8x1xf32>
      %176 = vector.broadcast %175 : vector<8x1xf32> to vector<8x8xf32>
      %177 = arith.mulf %172, %176 : vector<8x8xf32>
      %c2_112 = arith.constant 2 : index
      %c0_113 = arith.constant 0 : index
      %c0_114 = arith.constant 0 : index
      %178 = vector.load %arg10[%c2_112, %c0_113, %c0_114] : memref<4x8x8xf32, #tpu.memory_space<vmem>>, vector<1x8x8xf32>
      %179 = vector.shape_cast %178 : vector<1x8x8xf32> to vector<8x8xf32>
      %c2_115 = arith.constant 2 : index
      %c0_116 = arith.constant 0 : index
      %c0_117 = arith.constant 0 : index
      %180 = vector.load %arg9[%c2_115, %c0_116, %c0_117] : memref<4x8x1xf32, #tpu.memory_space<vmem>>, vector<1x8x1xf32>
      %181 = vector.shape_cast %180 : vector<1x8x1xf32> to vector<8x1xf32>
      %182 = tpu.reciprocal %181 {approx = true} : vector<8x1xf32> -> vector<8x1xf32>
      %183 = vector.broadcast %182 : vector<8x1xf32> to vector<8x8xf32>
      %184 = arith.mulf %179, %183 : vector<8x8xf32>
      %c3_118 = arith.constant 3 : index
      %c0_119 = arith.constant 0 : index
      %c0_120 = arith.constant 0 : index
      %185 = vector.load %arg10[%c3_118, %c0_119, %c0_120] : memref<4x8x8xf32, #tpu.memory_space<vmem>>, vector<1x8x8xf32>
      %186 = vector.shape_cast %185 : vector<1x8x8xf32> to vector<8x8xf32>
      %c3_121 = arith.constant 3 : index
      %c0_122 = arith.constant 0 : index
      %c0_123 = arith.constant 0 : index
      %187 = vector.load %arg9[%c3_121, %c0_122, %c0_123] : memref<4x8x1xf32, #tpu.memory_space<vmem>>, vector<1x8x1xf32>
      %188 = vector.shape_cast %187 : vector<1x8x1xf32> to vector<8x1xf32>
      %189 = tpu.reciprocal %188 {approx = true} : vector<8x1xf32> -> vector<8x1xf32>
      %190 = vector.broadcast %189 : vector<8x1xf32> to vector<8x8xf32>
      %191 = arith.mulf %186, %190 : vector<8x8xf32>
      %192 = tpu.concatenate %170, %177, %184, %191 in 1 : vector<8x8xf32>, vector<8x8xf32>, vector<8x8xf32>, vector<8x8xf32> -> vector<8x32xf32>
      %c0_124 = arith.constant 0 : index
      %c0_125 = arith.constant 0 : index
      %c0_126 = arith.constant 0 : index
      %193 = vector.load %arg7[%c0_124, %c0_125, %c0_126] : memref<1x8x32xf32, #tpu.memory_space<vmem>>, vector<1x8x32xf32>
      %194 = vector.shape_cast %193 : vector<1x8x32xf32> to vector<8x32xf32>
      %195 = vector.shape_cast %192 : vector<8x32xf32> to vector<1x8x32xf32>
      tpu.vector_store %arg7[%c0_124, %c0_125, %c0_126], %195 {strides = array<i32>} : memref<1x8x32xf32, #tpu.memory_space<vmem>>, vector<1x8x32xf32>,
    } else {
    }
    return
  }
  func.func @transform_0(%arg0: i32, %arg1: i32, %arg2: i32) -> (i32, i32, i32) {
    %c0_i32 = arith.constant 0 : i32
    %c0_i32_0 = arith.constant 0 : i32
    return %arg0, %arg1, %c0_i32 : i32, i32, i32
  }
  func.func @transform_1(%arg0: i32, %arg1: i32, %arg2: i32) -> (i32, i32, i32) {
    %c0_i32 = arith.constant 0 : i32
    %c0_i32_0 = arith.constant 0 : i32
    return %arg0, %arg2, %c0_i32 : i32, i32, i32
  }
  func.func @transform_2(%arg0: i32, %arg1: i32, %arg2: i32) -> (i32, i32, i32) {
    %c0_i32 = arith.constant 0 : i32
    %c0_i32_0 = arith.constant 0 : i32
    return %arg0, %arg2, %c0_i32 : i32, i32, i32
  }
  func.func @transform_3(%arg0: i32, %arg1: i32, %arg2: i32) -> (i32, i32, i32, i32) {
    %c0_i32 = arith.constant 0 : i32
    %c0_i32_0 = arith.constant 0 : i32
    %c0_i32_1 = arith.constant 0 : i32
    return %arg0, %c0_i32, %c0_i32_0, %arg2 : i32, i32, i32, i32
  }
  func.func @transform_4(%arg0: i32, %arg1: i32, %arg2: i32) -> (i32, i32, i32) {
    %c0_i32 = arith.constant 0 : i32
    %c0_i32_0 = arith.constant 0 : i32
    return %arg0, %arg1, %c0_i32 : i32, i32, i32
  }
}

module attributes {stable_mosaic.version = 11 : i64} {
  func.func @_qkv_proj_kernel(%arg0: i32, %arg1: i32, %arg2: i32, %arg3: memref<16x32xf32, #tpu.memory_space<vmem>>, %arg4: memref<32x32xf32, #tpu.memory_space<vmem>>, %arg5: memref<32x32xf32, #tpu.memory_space<vmem>>, %arg6: memref<32x32xf32, #tpu.memory_space<vmem>>, %arg7: memref<1x32xf32, #tpu.memory_space<vmem>>, %arg8: memref<1x32xf32, #tpu.memory_space<vmem>>, %arg9: memref<1x32xf32, #tpu.memory_space<vmem>>, %arg10: memref<16x32xf32, #tpu.memory_space<vmem>>, %arg11: memref<16x32xf32, #tpu.memory_space<vmem>>, %arg12: memref<16x32xf32, #tpu.memory_space<vmem>>, %arg13: memref<16x32xf32, #tpu.memory_space<vmem>>, %arg14: memref<16x32xf32, #tpu.memory_space<vmem>>, %arg15: memref<16x32xf32, #tpu.memory_space<vmem>>) attributes {dimension_semantics = [#tpu.dimension_semantics<parallel>, #tpu.dimension_semantics<parallel>, #tpu.dimension_semantics<arbitrary>], iteration_bounds = array<i64: 1, 1, 1>, scalar_prefetch = 0 : i64, scratch_operands = 3 : i64, tpu.core_type = #tpu.core_type<tc>, window_params = [{transform_indices = @transform_0, window_bounds = array<i64: 16, 32>}, {transform_indices = @transform_1, window_bounds = array<i64: 32, 32>}, {transform_indices = @transform_2, window_bounds = array<i64: 32, 32>}, {transform_indices = @transform_3, window_bounds = array<i64: 32, 32>}, {transform_indices = @transform_4, window_bounds = array<i64: 1, 32>}, {transform_indices = @transform_5, window_bounds = array<i64: 1, 32>}, {transform_indices = @transform_6, window_bounds = array<i64: 1, 32>}, {transform_indices = @transform_7, window_bounds = array<i64: 16, 32>}, {transform_indices = @transform_8, window_bounds = array<i64: 16, 32>}, {transform_indices = @transform_9, window_bounds = array<i64: 16, 32>}]} {
    %c0_i32 = arith.constant 0 : i32
    %0 = arith.cmpi eq, %arg2, %c0_i32 : i32
    %1 = arith.extui %0 : i1 to i32
    %c0_i32_0 = arith.constant 0 : i32
    %2 = arith.cmpi ne, %1, %c0_i32_0 : i32
    scf.if %2 {
      %cst_24 = arith.constant 0.000000e+00 : f32
      %22 = vector.broadcast %cst_24 : f32 to vector<16x32xf32>
      %c0_25 = arith.constant 0 : index
      %c0_26 = arith.constant 0 : index
      %23 = vector.load %arg13[%c0_25, %c0_26] : memref<16x32xf32, #tpu.memory_space<vmem>>, vector<16x32xf32>
      tpu.vector_store %arg13[%c0_25, %c0_26], %22 {strides = array<i32>} : memref<16x32xf32, #tpu.memory_space<vmem>>, vector<16x32xf32>,
      %cst_27 = arith.constant 0.000000e+00 : f32
      %24 = vector.broadcast %cst_27 : f32 to vector<16x32xf32>
      %c0_28 = arith.constant 0 : index
      %c0_29 = arith.constant 0 : index
      %25 = vector.load %arg14[%c0_28, %c0_29] : memref<16x32xf32, #tpu.memory_space<vmem>>, vector<16x32xf32>
      tpu.vector_store %arg14[%c0_28, %c0_29], %24 {strides = array<i32>} : memref<16x32xf32, #tpu.memory_space<vmem>>, vector<16x32xf32>,
      %cst_30 = arith.constant 0.000000e+00 : f32
      %26 = vector.broadcast %cst_30 : f32 to vector<16x32xf32>
      %c0_31 = arith.constant 0 : index
      %c0_32 = arith.constant 0 : index
      %27 = vector.load %arg15[%c0_31, %c0_32] : memref<16x32xf32, #tpu.memory_space<vmem>>, vector<16x32xf32>
      tpu.vector_store %arg15[%c0_31, %c0_32], %26 {strides = array<i32>} : memref<16x32xf32, #tpu.memory_space<vmem>>, vector<16x32xf32>,
    } else {
    }
    %c0 = arith.constant 0 : index
    %c0_1 = arith.constant 0 : index
    %3 = vector.load %arg3[%c0, %c0_1] : memref<16x32xf32, #tpu.memory_space<vmem>>, vector<16x32xf32>
    %c0_2 = arith.constant 0 : index
    %c0_3 = arith.constant 0 : index
    %4 = vector.load %arg13[%c0_2, %c0_3] : memref<16x32xf32, #tpu.memory_space<vmem>>, vector<16x32xf32>
    %c0_4 = arith.constant 0 : index
    %c0_5 = arith.constant 0 : index
    %5 = vector.load %arg4[%c0_4, %c0_5] : memref<32x32xf32, #tpu.memory_space<vmem>>, vector<32x32xf32>
    %cst = arith.constant dense<0.000000e+00> : vector<16x32xf32>
    %6 = tpu.matmul %3, %5, %cst {dimension_numbers = #tpu.dot_dimension_numbers<[1], [1], [0], [0], [0, 0, 1, 0], [], []>} : vector<16x32xf32>, vector<32x32xf32>, vector<16x32xf32> -> vector<16x32xf32>
    %7 = arith.addf %4, %6 : vector<16x32xf32>
    %c0_6 = arith.constant 0 : index
    %c0_7 = arith.constant 0 : index
    %8 = vector.load %arg13[%c0_6, %c0_7] : memref<16x32xf32, #tpu.memory_space<vmem>>, vector<16x32xf32>
    tpu.vector_store %arg13[%c0_6, %c0_7], %7 {strides = array<i32>} : memref<16x32xf32, #tpu.memory_space<vmem>>, vector<16x32xf32>,
    %c0_8 = arith.constant 0 : index
    %c0_9 = arith.constant 0 : index
    %9 = vector.load %arg14[%c0_8, %c0_9] : memref<16x32xf32, #tpu.memory_space<vmem>>, vector<16x32xf32>
    %c0_10 = arith.constant 0 : index
    %c0_11 = arith.constant 0 : index
    %10 = vector.load %arg5[%c0_10, %c0_11] : memref<32x32xf32, #tpu.memory_space<vmem>>, vector<32x32xf32>
    %cst_12 = arith.constant dense<0.000000e+00> : vector<16x32xf32>
    %11 = tpu.matmul %3, %10, %cst_12 {dimension_numbers = #tpu.dot_dimension_numbers<[1], [1], [0], [0], [0, 0, 1, 0], [], []>} : vector<16x32xf32>, vector<32x32xf32>, vector<16x32xf32> -> vector<16x32xf32>
    %12 = arith.addf %9, %11 : vector<16x32xf32>
    %c0_13 = arith.constant 0 : index
    %c0_14 = arith.constant 0 : index
    %13 = vector.load %arg14[%c0_13, %c0_14] : memref<16x32xf32, #tpu.memory_space<vmem>>, vector<16x32xf32>
    tpu.vector_store %arg14[%c0_13, %c0_14], %12 {strides = array<i32>} : memref<16x32xf32, #tpu.memory_space<vmem>>, vector<16x32xf32>,
    %c0_15 = arith.constant 0 : index
    %c0_16 = arith.constant 0 : index
    %14 = vector.load %arg15[%c0_15, %c0_16] : memref<16x32xf32, #tpu.memory_space<vmem>>, vector<16x32xf32>
    %c0_17 = arith.constant 0 : index
    %c0_18 = arith.constant 0 : index
    %15 = vector.load %arg6[%c0_17, %c0_18] : memref<32x32xf32, #tpu.memory_space<vmem>>, vector<32x32xf32>
    %cst_19 = arith.constant dense<0.000000e+00> : vector<16x32xf32>
    %16 = tpu.matmul %3, %15, %cst_19 {dimension_numbers = #tpu.dot_dimension_numbers<[1], [1], [0], [0], [0, 0, 1, 0], [], []>} : vector<16x32xf32>, vector<32x32xf32>, vector<16x32xf32> -> vector<16x32xf32>
    %17 = arith.addf %14, %16 : vector<16x32xf32>
    %c0_20 = arith.constant 0 : index
    %c0_21 = arith.constant 0 : index
    %18 = vector.load %arg15[%c0_20, %c0_21] : memref<16x32xf32, #tpu.memory_space<vmem>>, vector<16x32xf32>
    tpu.vector_store %arg15[%c0_20, %c0_21], %17 {strides = array<i32>} : memref<16x32xf32, #tpu.memory_space<vmem>>, vector<16x32xf32>,
    %c0_i32_22 = arith.constant 0 : i32
    %19 = arith.cmpi eq, %arg2, %c0_i32_22 : i32
    %20 = arith.extui %19 : i1 to i32
    %c0_i32_23 = arith.constant 0 : i32
    %21 = arith.cmpi ne, %20, %c0_i32_23 : i32
    scf.if %21 {
      %c0_24 = arith.constant 0 : index
      %c0_25 = arith.constant 0 : index
      %22 = vector.load %arg13[%c0_24, %c0_25] : memref<16x32xf32, #tpu.memory_space<vmem>>, vector<16x32xf32>
      %c0_26 = arith.constant 0 : index
      %c0_27 = arith.constant 0 : index
      %23 = vector.load %arg7[%c0_26, %c0_27] : memref<1x32xf32, #tpu.memory_space<vmem>>, vector<1x32xf32>
      %24 = vector.broadcast %23 : vector<1x32xf32> to vector<16x32xf32>
      %25 = arith.addf %22, %24 : vector<16x32xf32>
      %c0_28 = arith.constant 0 : index
      %c0_29 = arith.constant 0 : index
      %26 = vector.load %arg10[%c0_28, %c0_29] : memref<16x32xf32, #tpu.memory_space<vmem>>, vector<16x32xf32>
      tpu.vector_store %arg10[%c0_28, %c0_29], %25 {strides = array<i32>} : memref<16x32xf32, #tpu.memory_space<vmem>>, vector<16x32xf32>,
      %c0_30 = arith.constant 0 : index
      %c0_31 = arith.constant 0 : index
      %27 = vector.load %arg14[%c0_30, %c0_31] : memref<16x32xf32, #tpu.memory_space<vmem>>, vector<16x32xf32>
      %c0_32 = arith.constant 0 : index
      %c0_33 = arith.constant 0 : index
      %28 = vector.load %arg8[%c0_32, %c0_33] : memref<1x32xf32, #tpu.memory_space<vmem>>, vector<1x32xf32>
      %29 = vector.broadcast %28 : vector<1x32xf32> to vector<16x32xf32>
      %30 = arith.addf %27, %29 : vector<16x32xf32>
      %c0_34 = arith.constant 0 : index
      %c0_35 = arith.constant 0 : index
      %31 = vector.load %arg11[%c0_34, %c0_35] : memref<16x32xf32, #tpu.memory_space<vmem>>, vector<16x32xf32>
      tpu.vector_store %arg11[%c0_34, %c0_35], %30 {strides = array<i32>} : memref<16x32xf32, #tpu.memory_space<vmem>>, vector<16x32xf32>,
      %c0_36 = arith.constant 0 : index
      %c0_37 = arith.constant 0 : index
      %32 = vector.load %arg15[%c0_36, %c0_37] : memref<16x32xf32, #tpu.memory_space<vmem>>, vector<16x32xf32>
      %c0_38 = arith.constant 0 : index
      %c0_39 = arith.constant 0 : index
      %33 = vector.load %arg9[%c0_38, %c0_39] : memref<1x32xf32, #tpu.memory_space<vmem>>, vector<1x32xf32>
      %34 = vector.broadcast %33 : vector<1x32xf32> to vector<16x32xf32>
      %35 = arith.addf %32, %34 : vector<16x32xf32>
      %c0_40 = arith.constant 0 : index
      %c0_41 = arith.constant 0 : index
      %36 = vector.load %arg12[%c0_40, %c0_41] : memref<16x32xf32, #tpu.memory_space<vmem>>, vector<16x32xf32>
      tpu.vector_store %arg12[%c0_40, %c0_41], %35 {strides = array<i32>} : memref<16x32xf32, #tpu.memory_space<vmem>>, vector<16x32xf32>,
    } else {
    }
    return
  }
  func.func @transform_0(%arg0: i32, %arg1: i32, %arg2: i32) -> (i32, i32) {
    %c0_i32 = arith.constant 0 : i32
    return %arg0, %arg2 : i32, i32
  }
  func.func @transform_1(%arg0: i32, %arg1: i32, %arg2: i32) -> (i32, i32) {
    %c0_i32 = arith.constant 0 : i32
    %0 = arith.addi %c0_i32, %arg1 : i32
    %c0_i32_0 = arith.constant 0 : i32
    return %0, %arg2 : i32, i32
  }
  func.func @transform_2(%arg0: i32, %arg1: i32, %arg2: i32) -> (i32, i32) {
    %c1_i32 = arith.constant 1 : i32
    %0 = arith.addi %c1_i32, %arg1 : i32
    %c0_i32 = arith.constant 0 : i32
    return %0, %arg2 : i32, i32
  }
  func.func @transform_3(%arg0: i32, %arg1: i32, %arg2: i32) -> (i32, i32) {
    %c2_i32 = arith.constant 2 : i32
    %0 = arith.addi %c2_i32, %arg1 : i32
    %c0_i32 = arith.constant 0 : i32
    return %0, %arg2 : i32, i32
  }
  func.func @transform_4(%arg0: i32, %arg1: i32, %arg2: i32) -> (i32, i32) {
    %c0_i32 = arith.constant 0 : i32
    %c0_i32_0 = arith.constant 0 : i32
    return %c0_i32, %arg1 : i32, i32
  }
  func.func @transform_5(%arg0: i32, %arg1: i32, %arg2: i32) -> (i32, i32) {
    %c0_i32 = arith.constant 0 : i32
    %c0_i32_0 = arith.constant 0 : i32
    return %c0_i32, %arg1 : i32, i32
  }
  func.func @transform_6(%arg0: i32, %arg1: i32, %arg2: i32) -> (i32, i32) {
    %c0_i32 = arith.constant 0 : i32
    %c0_i32_0 = arith.constant 0 : i32
    return %c0_i32, %arg1 : i32, i32
  }
  func.func @transform_7(%arg0: i32, %arg1: i32, %arg2: i32) -> (i32, i32) {
    %c0_i32 = arith.constant 0 : i32
    return %arg0, %arg1 : i32, i32
  }
  func.func @transform_8(%arg0: i32, %arg1: i32, %arg2: i32) -> (i32, i32) {
    %c0_i32 = arith.constant 0 : i32
    return %arg0, %arg1 : i32, i32
  }
  func.func @transform_9(%arg0: i32, %arg1: i32, %arg2: i32) -> (i32, i32) {
    %c0_i32 = arith.constant 0 : i32
    return %arg0, %arg1 : i32, i32
  }
}

module attributes {stable_mosaic.version = 11 : i64} {
  func.func @_linear_nt_kernel(%arg0: i32, %arg1: i32, %arg2: i32, %arg3: memref<16x32xf32, #tpu.memory_space<vmem>>, %arg4: memref<32x32xf32, #tpu.memory_space<vmem>>, %arg5: memref<1x32xf32, #tpu.memory_space<vmem>>, %arg6: memref<16x32xf32, #tpu.memory_space<vmem>>, %arg7: memref<16x32xf32, #tpu.memory_space<vmem>>) attributes {dimension_semantics = [#tpu.dimension_semantics<parallel>, #tpu.dimension_semantics<parallel>, #tpu.dimension_semantics<arbitrary>], iteration_bounds = array<i64: 1, 1, 1>, scalar_prefetch = 0 : i64, scratch_operands = 1 : i64, tpu.core_type = #tpu.core_type<tc>, window_params = [{transform_indices = @transform_0, window_bounds = array<i64: 16, 32>}, {transform_indices = @transform_1, window_bounds = array<i64: 32, 32>}, {transform_indices = @transform_2, window_bounds = array<i64: 1, 32>}, {transform_indices = @transform_3, window_bounds = array<i64: 16, 32>}]} {
    %c0_i32 = arith.constant 0 : i32
    %0 = arith.cmpi eq, %arg2, %c0_i32 : i32
    %1 = arith.extui %0 : i1 to i32
    %c0_i32_0 = arith.constant 0 : i32
    %2 = arith.cmpi ne, %1, %c0_i32_0 : i32
    scf.if %2 {
      %cst_10 = arith.constant 0.000000e+00 : f32
      %12 = vector.broadcast %cst_10 : f32 to vector<16x32xf32>
      %c0_11 = arith.constant 0 : index
      %c0_12 = arith.constant 0 : index
      %13 = vector.load %arg7[%c0_11, %c0_12] : memref<16x32xf32, #tpu.memory_space<vmem>>, vector<16x32xf32>
      tpu.vector_store %arg7[%c0_11, %c0_12], %12 {strides = array<i32>} : memref<16x32xf32, #tpu.memory_space<vmem>>, vector<16x32xf32>,
    } else {
    }
    %c0 = arith.constant 0 : index
    %c0_1 = arith.constant 0 : index
    %3 = vector.load %arg7[%c0, %c0_1] : memref<16x32xf32, #tpu.memory_space<vmem>>, vector<16x32xf32>
    %c0_2 = arith.constant 0 : index
    %c0_3 = arith.constant 0 : index
    %4 = vector.load %arg3[%c0_2, %c0_3] : memref<16x32xf32, #tpu.memory_space<vmem>>, vector<16x32xf32>
    %c0_4 = arith.constant 0 : index
    %c0_5 = arith.constant 0 : index
    %5 = vector.load %arg4[%c0_4, %c0_5] : memref<32x32xf32, #tpu.memory_space<vmem>>, vector<32x32xf32>
    %cst = arith.constant dense<0.000000e+00> : vector<16x32xf32>
    %6 = tpu.matmul %4, %5, %cst {dimension_numbers = #tpu.dot_dimension_numbers<[1], [1], [0], [0], [0, 0, 1, 0], [], []>} : vector<16x32xf32>, vector<32x32xf32>, vector<16x32xf32> -> vector<16x32xf32>
    %7 = arith.addf %3, %6 : vector<16x32xf32>
    %c0_6 = arith.constant 0 : index
    %c0_7 = arith.constant 0 : index
    %8 = vector.load %arg7[%c0_6, %c0_7] : memref<16x32xf32, #tpu.memory_space<vmem>>, vector<16x32xf32>
    tpu.vector_store %arg7[%c0_6, %c0_7], %7 {strides = array<i32>} : memref<16x32xf32, #tpu.memory_space<vmem>>, vector<16x32xf32>,
    %c0_i32_8 = arith.constant 0 : i32
    %9 = arith.cmpi eq, %arg2, %c0_i32_8 : i32
    %10 = arith.extui %9 : i1 to i32
    %c0_i32_9 = arith.constant 0 : i32
    %11 = arith.cmpi ne, %10, %c0_i32_9 : i32
    scf.if %11 {
      %c0_10 = arith.constant 0 : index
      %c0_11 = arith.constant 0 : index
      %12 = vector.load %arg7[%c0_10, %c0_11] : memref<16x32xf32, #tpu.memory_space<vmem>>, vector<16x32xf32>
      %c0_12 = arith.constant 0 : index
      %c0_13 = arith.constant 0 : index
      %13 = vector.load %arg5[%c0_12, %c0_13] : memref<1x32xf32, #tpu.memory_space<vmem>>, vector<1x32xf32>
      %14 = vector.broadcast %13 : vector<1x32xf32> to vector<16x32xf32>
      %15 = arith.addf %12, %14 : vector<16x32xf32>
      %c0_14 = arith.constant 0 : index
      %c0_15 = arith.constant 0 : index
      %16 = vector.load %arg6[%c0_14, %c0_15] : memref<16x32xf32, #tpu.memory_space<vmem>>, vector<16x32xf32>
      tpu.vector_store %arg6[%c0_14, %c0_15], %15 {strides = array<i32>} : memref<16x32xf32, #tpu.memory_space<vmem>>, vector<16x32xf32>,
    } else {
    }
    return
  }
  func.func @transform_0(%arg0: i32, %arg1: i32, %arg2: i32) -> (i32, i32) {
    %c0_i32 = arith.constant 0 : i32
    return %arg0, %arg2 : i32, i32
  }
  func.func @transform_1(%arg0: i32, %arg1: i32, %arg2: i32) -> (i32, i32) {
    %c0_i32 = arith.constant 0 : i32
    return %arg1, %arg2 : i32, i32
  }
  func.func @transform_2(%arg0: i32, %arg1: i32, %arg2: i32) -> (i32, i32) {
    %c0_i32 = arith.constant 0 : i32
    %c0_i32_0 = arith.constant 0 : i32
    return %c0_i32, %arg1 : i32, i32
  }
  func.func @transform_3(%arg0: i32, %arg1: i32, %arg2: i32) -> (i32, i32) {
    %c0_i32 = arith.constant 0 : i32
    return %arg0, %arg1 : i32, i32
  }
}

</mosaic_0001>

<llo_original>
// kernel: deepspeed_self_attention_forward.5
$region0: #{deepspeed_self_attention_forward.5}
  #allocation0 [shape = 'u32[]', space=smem, size = 0x4, offset = 0x4, fixed_abs, tag = 'smem constant byte address 0x4 - core index']
  #allocation1 [shape = 'u32[144,128]{1,0:T(1,128)}', space=vmem, size = 0x12000, scoped, tag = 'internal scratch']
  #allocation2 [shape = 'f32[16,32]{1,0:T(8,128)}', space=vmem, size = 0x2000, scoped, tag = 'scratch operand']
  %s0 = inlined_call_operand.vmem [shape: f32[16,32], index: 0, kind: input, shape index: {}]
  %s1 = inlined_call_operand.vmem [shape: f32[32,32], index: 1, kind: input, shape index: {}]
  %s2 = inlined_call_operand.vmem [shape: f32[1,32], index: 2, kind: input, shape index: {}]
  %s3 = inlined_call_operand.hbm [shape: f32[16,32], index: 3, kind: output, shape index: {}]
  %s4 = sld [smem:[#allocation0]]
  $region30: #{deepspeed_self_attention_forward.5} parent=0
    _
  %s6 = ssub.s32 1, %s4
  %s7 = scalar_select 0, %s6, %s4
  $region1: #{deepspeed_self_attention_forward.5} parent=0
    #allocation3 [shape = 'u8[8192]{0}', space=vmem, size = 0x2000, scoped, tag = 'output window, operand 0, single buffered']
    #allocation4 [shape = 's32[1]{0}', space=sflag, size = 0x4, scoped, tag = 'scoped memory for deepspeed_self_attention_forward.5']
    %8 = vsyncpa [#allocation4], 0
    // Predicated region
    $region2: #{deepspeed_self_attention_forward.5} parent=1 // pred_check
      _
    $region3: #{deepspeed_self_attention_forward.5} parent=1 // pred_check_branch
      %10 = sbr.rel (0) target = $region5
    $region4: #{deepspeed_self_attention_forward.5} parent=1 // pred_region
      _
    $region5: #{deepspeed_self_attention_forward.5} parent=1 // pred_fallthru
      _
    // Predicated region
    $region6: #{deepspeed_self_attention_forward.5} parent=1 // pred_check
      _
    $region7: #{deepspeed_self_attention_forward.5} parent=1 // pred_check_branch
      %12 = sbr.rel (0) target = $region9
    $region8: #{deepspeed_self_attention_forward.5} parent=1 // pred_region
      _
    $region9: #{deepspeed_self_attention_forward.5} parent=1 // pred_fallthru
      _
    // Predicated region
    $region10: #{deepspeed_self_attention_forward.5} parent=1 // pred_check
      _
    $region11: #{deepspeed_self_attention_forward.5} parent=1 // pred_check_branch
      %14 = sbr.rel (0) target = $region13
    $region12: #{deepspeed_self_attention_forward.5} parent=1 // pred_region
      _
    $region13: #{deepspeed_self_attention_forward.5} parent=1 // pred_fallthru
      _
    %p15 = scmp.eq.s32.totalorder 0, 0
    // Predicated region
    $region14: #{deepspeed_self_attention_forward.5} parent=1 // pred_check
      %p16 = pneg %p15
    $region15: #{deepspeed_self_attention_forward.5} parent=1 // pred_check_branch
      %18 = sbr.rel (%p16) target = $region17
    $region16: #{deepspeed_self_attention_forward.5} parent=1 // pred_region
      %vm19 = vcmask 261120
      %20 = vst.msk [vmem:[#allocation2] sm:$0xff] %vm19, 0.0
      %21 = vst.msk [vmem:[#allocation2 + $0x8] sm:$0xff] %vm19, 0.0
    $region17: #{deepspeed_self_attention_forward.5} parent=1 // pred_fallthru
      _
    %v22 = vld [vmem:[#allocation2] sm:$0xff]
    %v23 = vld [vmem:[#allocation2 + $0x8] sm:$0xff]
    %v24 = vld [vmem:[%s0] sm:$0xff]
    %v25 = vld [vmem:[%s0 + $0x8] sm:$0xff]
    %v26 = vld [vmem:[%s1] sm:$0xff]
    %v27 = vld [vmem:[%s1 + $0x8] sm:$0xff]
    %v28 = vld [vmem:[%s1 + $0x10] sm:$0xff]
    %v29 = vld [vmem:[%s1 + $0x18] sm:$0xff]
    %vm30 = vcmask 261120
    %v32 = vsel %vm30, %v24, 0
    %v35 = vsel %vm30, %v25, 0
    %v38 = vsel %vm30, %v26, 0
    %v41 = vsel %vm30, %v27, 0
    %v44 = vsel %vm30, %v28, 0
    %v47 = vsel %vm30, %v29, 0
    %49 = vmatprep.subr.mxu0 0.0
    %50 = vmatpush1.xpose.msra.mxu0 %v38
    %51 = vmatprep.subr.mxu0 0.0
    %52 = vmatpush1.xpose.msra.mxu0 %v41
    %53 = vmatprep.subr.mxu0 0.0
    %54 = vmatpush1.xpose.msra.mxu0 %v44
    %55 = vmatprep.subr.mxu0 0.0
    %56 = vmatpush1.xpose.msra.mxu0 %v47
    %57 = vmatprep.subr.mxu0 0.0
    %58 = vmatpush1.xpose.msra.mxu0 0.0
    %59 = vmatprep.subr.mxu0 0.0
    %60 = vmatpush1.xpose.msra.mxu0 0.0
    %61 = vmatprep.subr.mxu0 0.0
    %62 = vmatpush1.xpose.msra.mxu0 0.0
    %63 = vmatprep.subr.mxu0 0.0
    %64 = vmatpush1.xpose.msra.mxu0 0.0
    %65 = vmatprep.subr.mxu0 0.0
    %66 = vmatpush1.xpose.msra.mxu0 0.0
    %67 = vmatprep.subr.mxu0 0.0
    %68 = vmatpush1.xpose.msra.mxu0 0.0
    %69 = vmatprep.subr.mxu0 0.0
    %70 = vmatpush1.xpose.msra.mxu0 0.0
    %71 = vmatprep.subr.mxu0 0.0
    %72 = vmatpush1.xpose.msra.mxu0 0.0
    %73 = vmatprep.subr.mxu0 0.0
    %74 = vmatpush1.xpose.msra.mxu0 0.0
    %75 = vmatprep.subr.mxu0 0.0
    %76 = vmatpush1.xpose.msra.mxu0 0.0
    %77 = vmatprep.subr.mxu0 0.0
    %78 = vmatpush1.xpose.msra.mxu0 0.0
    %79 = vmatprep.subr.mxu0 0.0
    %80 = vmatpush1.xpose.msra.mxu0 0.0
    %81 = vmatprep.subr.mxu0 0.0
    %82 = vmatpush1.xpose.msra.mxu0 0.0
    %83 = vmatprep.subr.mxu0 0.0
    %84 = vmatpush1.xpose.msra.mxu0 0.0
    %85 = vmatprep.subr.mxu0 0.0
    %86 = vmatpush1.xpose.msra.mxu0 0.0
    %87 = vmatprep.subr.mxu0 0.0
    %88 = vmatpush1.xpose.msra.mxu0 0.0
    %89 = vmatprep.subr.mxu0 0.0
    %90 = vmatpush1.xpose.msra.mxu0 0.0
    %91 = vmatprep.subr.mxu0 0.0
    %92 = vmatpush1.xpose.msra.mxu0 0.0
    %93 = vmatprep.subr.mxu0 0.0
    %94 = vmatpush1.xpose.msra.mxu0 0.0
    %95 = vmatprep.subr.mxu0 0.0
    %96 = vmatpush1.xpose.msra.mxu0 0.0
    %97 = vmatprep.subr.mxu0 0.0
    %98 = vmatpush1.xpose.msra.mxu0 0.0
    %99 = vmatprep.subr.mxu0 0.0
    %100 = vmatpush1.xpose.msra.mxu0 0.0
    %101 = vmatprep.subr.mxu0 0.0
    %102 = vmatpush1.xpose.msra.mxu0 0.0
    %103 = vmatprep.subr.mxu0 0.0
    %104 = vmatpush1.xpose.msra.mxu0 0.0
    %105 = vmatprep.subr.mxu0 0.0
    %106 = vmatpush1.xpose.msra.mxu0 0.0
    %107 = vmatprep.subr.mxu0 0.0
    %108 = vmatpush1.xpose.msra.mxu0 0.0
    %109 = vmatprep.subr.mxu0 0.0
    %110 = vmatpush1.xpose.msra.mxu0 0.0
    %111 = vmatprep.subr.mxu0 0.0
    %112 = vmatpush1.xpose.msra.mxu0 0.0
    %113 = vmatprep.mubr.f32.mxu0 0.0
    %114 = vmatmul.mubr.f32.gmra.mrb[0].mxu0 %v32
    %v115 = vpop.f32.mrb[0].mxu0
    %v116 = vadd.f32 0.0, %v115
    %v117 = vpop.f32.mrb[0].mxu0
    %118 = vmatprep.mubr.f32.mxu0 0.0
    %119 = vmatmul.mubr.f32.gmra.mrb[0].mxu0 %v35
    %v120 = vpop.f32.mrb[0].mxu0
    %v121 = vadd.f32 0.0, %v120
    %v122 = vpop.f32.mrb[0].mxu0
    %123 = vdwg.mxu0
    %v124 = vadd.f32 %v22, %v116
    %v125 = vadd.f32 %v23, %v121
    %126 = vst.msk [vmem:[#allocation2] sm:$0xff] %vm30, %v124
    %127 = vst.msk [vmem:[#allocation2 + $0x8] sm:$0xff] %vm30, %v125
    // Predicated region
    $region18: #{deepspeed_self_attention_forward.5} parent=1 // pred_check
      %p128 = pneg %p15
    $region19: #{deepspeed_self_attention_forward.5} parent=1 // pred_check_branch
      %130 = sbr.rel (%p128) target = $region21
    $region20: #{deepspeed_self_attention_forward.5} parent=1 // pred_region
      %v131 = vld [vmem:[#allocation2] sm:$0xff]
      %v132 = vld [vmem:[#allocation2 + $0x8] sm:$0xff]
      %v133 = vld [vmem:[%s2] sm:$0x1]
      %v135 = vlaneseq
      %v136 = vshrl.u32 %v135, 7
      %v137 = vsub.s32 0, %v136
      %v138 = vrot.slane %v133, %v137
      %v140 = vadd.f32 %v131, %v138
      %v141 = vadd.f32 %v132, %v138
      %142 = vst.msk [vmem:[#allocation3] sm:$0xff] %vm30, %v140
      %143 = vst.msk [vmem:[#allocation3 + $0x8] sm:$0xff] %vm30, %v141
    $region21: #{deepspeed_self_attention_forward.5} parent=1 // pred_fallthru
      _
    // Predicated region
    $region22: #{deepspeed_self_attention_forward.5} parent=1 // pred_check
      _
    $region23: #{deepspeed_self_attention_forward.5} parent=1 // pred_check_branch
      %145 = sbr.rel (0) target = $region25
    $region24: #{deepspeed_self_attention_forward.5} parent=1 // pred_region
      %s147 = ssub.s32 256, 256
      %148 = vsyncadd [#allocation4], %s147
      %s149 = sshll.u32 [#allocation3], 4
      %s150 = int_to_ptr.vmem [resolvable:$true] %s149
      %155 = dma.vmem_to_hbm [thread:$0]  %s150, 256, %s3, [#allocation4], 128, 128, 8
    $region25: #{deepspeed_self_attention_forward.5} parent=1 // pred_fallthru
      _
    // Predicated region
    $region26: #{deepspeed_self_attention_forward.5} parent=1 // pred_check
      _
    $region27: #{deepspeed_self_attention_forward.5} parent=1 // pred_check_branch
      %157 = sbr.rel (0) target = $region29
    $region28: #{deepspeed_self_attention_forward.5} parent=1 // pred_region
      %158 = dma.done [#allocation4], 256
    $region29: #{deepspeed_self_attention_forward.5} parent=1 // pred_fallthru
      _
    %159 = vsyncpa [#allocation4], 1

// kernel: deepspeed_self_attention_forward.3
$region0: #{deepspeed_self_attention_forward.3}
  #allocation0 [shape = 'u32[]', space=smem, size = 0x4, offset = 0x4, fixed_abs, tag = 'smem constant byte address 0x4 - core index']
  #allocation1 [shape = 'u32[144,128]{1,0:T(1,128)}', space=vmem, size = 0x12000, scoped, tag = 'internal scratch']
  #allocation2 [shape = 'f32[16,32]{1,0:T(8,128)}', space=vmem, size = 0x2000, scoped, tag = 'scratch operand']
  #allocation3 [shape = 'f32[16,32]{1,0:T(8,128)}', space=vmem, size = 0x2000, scoped, tag = 'scratch operand']
  #allocation4 [shape = 'f32[16,32]{1,0:T(8,128)}', space=vmem, size = 0x2000, scoped, tag = 'scratch operand']
  %s0 = inlined_call_operand.vmem [shape: f32[16,32], index: 0, kind: input, shape index: {}]
  %s1 = inlined_call_operand.vmem [shape: f32[96,32], index: 1, kind: input, shape index: {}, may-alias: {1,2,3}]
  %s2 = inlined_call_operand.vmem [shape: f32[96,32], index: 2, kind: input, shape index: {}, may-alias: {1,2,3}]
  %s3 = inlined_call_operand.vmem [shape: f32[96,32], index: 3, kind: input, shape index: {}, may-alias: {1,2,3}]
  %s4 = inlined_call_operand.vmem [shape: f32[1,32], index: 4, kind: input, shape index: {}]
  %s5 = inlined_call_operand.vmem [shape: f32[1,32], index: 5, kind: input, shape index: {}]
  %s6 = inlined_call_operand.vmem [shape: f32[1,32], index: 6, kind: input, shape index: {}]
  %s7 = inlined_call_operand.vmem [shape: f32[16,32], index: 7, kind: output, shape index: {0}]
  %s8 = inlined_call_operand.vmem [shape: f32[16,32], index: 8, kind: output, shape index: {1}]
  %s9 = inlined_call_operand.vmem [shape: f32[16,32], index: 9, kind: output, shape index: {2}]
  %10 = xla_tuple %s7, %s8, %s9
  %s11 = sld [smem:[#allocation0]]
  $region62: #{deepspeed_self_attention_forward.3} parent=0
    _
  %s13 = ssub.s32 1, %s11
  %s14 = scalar_select 0, %s13, %s11
  // Predicated region
  $region2: #{deepspeed_self_attention_forward.3} parent=0 // pred_check
    _
  $region3: #{deepspeed_self_attention_forward.3} parent=0 // pred_check_branch
    %16 = sbr.rel (0) target = $region5
  $region4: #{deepspeed_self_attention_forward.3} parent=0 // pred_region
    _
  $region5: #{deepspeed_self_attention_forward.3} parent=0 // pred_fallthru
    _
  // Predicated region
  $region6: #{deepspeed_self_attention_forward.3} parent=0 // pred_check
    _
  $region7: #{deepspeed_self_attention_forward.3} parent=0 // pred_check_branch
    %18 = sbr.rel (0) target = $region9
  $region8: #{deepspeed_self_attention_forward.3} parent=0 // pred_region
    _
  $region9: #{deepspeed_self_attention_forward.3} parent=0 // pred_fallthru
    _
  // Predicated region
  $region10: #{deepspeed_self_attention_forward.3} parent=0 // pred_check
    _
  $region11: #{deepspeed_self_attention_forward.3} parent=0 // pred_check_branch
    %20 = sbr.rel (0) target = $region13
  $region12: #{deepspeed_self_attention_forward.3} parent=0 // pred_region
    %s21 = sadd.s32 0, 1
    %s22 = smul.u32 4, %s21
    %p23 = scmp.lt.s32.totalorder %s22, 11
    %s24 = scalar_select %p23, %s22, 11
    %s25 = smul.addr %s24, 8
    %s26 = scalar_lea.vmem %s2, %s25
    %s27 = sadd.s32 0, 1
    %s28 = smul.u32 4, %s27
  $region13: #{deepspeed_self_attention_forward.3} parent=0 // pred_fallthru
    _
  // Predicated region
  $region14: #{deepspeed_self_attention_forward.3} parent=0 // pred_check
    _
  $region15: #{deepspeed_self_attention_forward.3} parent=0 // pred_check_branch
    %30 = sbr.rel (0) target = $region17
  $region16: #{deepspeed_self_attention_forward.3} parent=0 // pred_region
    %s31 = sadd.s32 0, 2
    %s32 = smul.u32 4, %s31
    %p33 = scmp.lt.s32.totalorder %s32, 11
    %s34 = scalar_select %p33, %s32, 11
    %s35 = smul.addr %s34, 8
    %s36 = scalar_lea.vmem %s3, %s35
    %s37 = sadd.s32 0, 2
    %s38 = smul.u32 4, %s37
  $region17: #{deepspeed_self_attention_forward.3} parent=0 // pred_fallthru
    _
  // Predicated region
  $region18: #{deepspeed_self_attention_forward.3} parent=0 // pred_check
    _
  $region19: #{deepspeed_self_attention_forward.3} parent=0 // pred_check_branch
    %40 = sbr.rel (0) target = $region21
  $region20: #{deepspeed_self_attention_forward.3} parent=0 // pred_region
    _
  $region21: #{deepspeed_self_attention_forward.3} parent=0 // pred_fallthru
    _
  // Predicated region
  $region22: #{deepspeed_self_attention_forward.3} parent=0 // pred_check
    _
  $region23: #{deepspeed_self_attention_forward.3} parent=0 // pred_check_branch
    %42 = sbr.rel (0) target = $region25
  $region24: #{deepspeed_self_attention_forward.3} parent=0 // pred_region
    _
  $region25: #{deepspeed_self_attention_forward.3} parent=0 // pred_fallthru
    _
  // Predicated region
  $region26: #{deepspeed_self_attention_forward.3} parent=0 // pred_check
    _
  $region27: #{deepspeed_self_attention_forward.3} parent=0 // pred_check_branch
    %44 = sbr.rel (0) target = $region29
  $region28: #{deepspeed_self_attention_forward.3} parent=0 // pred_region
    _
  $region29: #{deepspeed_self_attention_forward.3} parent=0 // pred_fallthru
    _
  %s45 = sadd.s32 0, 1
  %s46 = smul.u32 4, %s45
  %p47 = scmp.lt.s32.totalorder %s46, 11
  %s48 = scalar_select %p47, %s46, 11
  %s49 = smul.addr %s48, 8
  %s50 = scalar_lea.vmem %s2, %s49
  %s51 = sadd.s32 0, 2
  %s52 = smul.u32 4, %s51
  %p53 = scmp.lt.s32.totalorder %s52, 11
  %s54 = scalar_select %p53, %s52, 11
  %s55 = smul.addr %s54, 8
  %s56 = scalar_lea.vmem %s3, %s55
  %s57 = sadd.s32 0, 1
  %s58 = smul.u32 4, %s57
  %p59 = scmp.lt.s32.totalorder %s58, 11
  %s60 = scalar_select %p59, %s58, 11
  %s61 = smul.addr %s60, 8
  %s62 = scalar_lea.vmem %s2, %s61
  %s63 = sadd.s32 0, 1
  %s64 = smul.u32 4, %s63
  %s65 = sadd.s32 0, 2
  %s66 = smul.u32 4, %s65
  %p67 = scmp.lt.s32.totalorder %s66, 11
  %s68 = scalar_select %p67, %s66, 11
  %s69 = smul.addr %s68, 8
  %s70 = scalar_lea.vmem %s3, %s69
  %s71 = sadd.s32 0, 2
  %s72 = smul.u32 4, %s71
  %p73 = scmp.eq.s32.totalorder 0, 0
  // Predicated region
  $region30: #{deepspeed_self_attention_forward.3} parent=0 // pred_check
    %p74 = pneg %p73
  $region31: #{deepspeed_self_attention_forward.3} parent=0 // pred_check_branch
    %76 = sbr.rel (%p74) target = $region33
  $region32: #{deepspeed_self_attention_forward.3} parent=0 // pred_region
    %vm77 = vcmask 261120
    %78 = vst.msk [vmem:[#allocation2] sm:$0xff] %vm77, 0.0
    %79 = vst.msk [vmem:[#allocation2 + $0x8] sm:$0xff] %vm77, 0.0
    %80 = vst.msk [vmem:[#allocation3] sm:$0xff] %vm77, 0.0
    %81 = vst.msk [vmem:[#allocation3 + $0x8] sm:$0xff] %vm77, 0.0
    %82 = vst.msk [vmem:[#allocation4] sm:$0xff] %vm77, 0.0
    %83 = vst.msk [vmem:[#allocation4 + $0x8] sm:$0xff] %vm77, 0.0
  $region33: #{deepspeed_self_attention_forward.3} parent=0 // pred_fallthru
    _
  %v84 = vld [vmem:[%s0] sm:$0xff]
  %v85 = vld [vmem:[%s0 + $0x8] sm:$0xff]
  %v86 = vld [vmem:[#allocation2] sm:$0xff]
  %v87 = vld [vmem:[#allocation2 + $0x8] sm:$0xff]
  %v88 = vld [vmem:[%s1] sm:$0xff]
  %v89 = vld [vmem:[%s1 + $0x8] sm:$0xff]
  %v90 = vld [vmem:[%s1 + $0x10] sm:$0xff]
  %v91 = vld [vmem:[%s1 + $0x18] sm:$0xff]
  %vm92 = vcmask 261120
  %v94 = vsel %vm92, %v84, 0
  %v97 = vsel %vm92, %v85, 0
  %v100 = vsel %vm92, %v88, 0
  %v103 = vsel %vm92, %v89, 0
  %v106 = vsel %vm92, %v90, 0
  %v109 = vsel %vm92, %v91, 0
  %111 = vmatprep.subr.mxu0 0.0
  %112 = vmatpush1.xpose.msra.mxu0 %v100
  %113 = vmatprep.subr.mxu0 0.0
  %114 = vmatpush1.xpose.msra.mxu0 %v103
  %115 = vmatprep.subr.mxu0 0.0
  %116 = vmatpush1.xpose.msra.mxu0 %v106
  %117 = vmatprep.subr.mxu0 0.0
  %118 = vmatpush1.xpose.msra.mxu0 %v109
  %119 = vmatprep.subr.mxu0 0.0
  %120 = vmatpush1.xpose.msra.mxu0 0.0
  %121 = vmatprep.subr.mxu0 0.0
  %122 = vmatpush1.xpose.msra.mxu0 0.0
  %123 = vmatprep.subr.mxu0 0.0
  %124 = vmatpush1.xpose.msra.mxu0 0.0
  %125 = vmatprep.subr.mxu0 0.0
  %126 = vmatpush1.xpose.msra.mxu0 0.0
  %127 = vmatprep.subr.mxu0 0.0
  %128 = vmatpush1.xpose.msra.mxu0 0.0
  %129 = vmatprep.subr.mxu0 0.0
  %130 = vmatpush1.xpose.msra.mxu0 0.0
  %131 = vmatprep.subr.mxu0 0.0
  %132 = vmatpush1.xpose.msra.mxu0 0.0
  %133 = vmatprep.subr.mxu0 0.0
  %134 = vmatpush1.xpose.msra.mxu0 0.0
  %135 = vmatprep.subr.mxu0 0.0
  %136 = vmatpush1.xpose.msra.mxu0 0.0
  %137 = vmatprep.subr.mxu0 0.0
  %138 = vmatpush1.xpose.msra.mxu0 0.0
  %139 = vmatprep.subr.mxu0 0.0
  %140 = vmatpush1.xpose.msra.mxu0 0.0
  %141 = vmatprep.subr.mxu0 0.0
  %142 = vmatpush1.xpose.msra.mxu0 0.0
  %143 = vmatprep.subr.mxu0 0.0
  %144 = vmatpush1.xpose.msra.mxu0 0.0
  %145 = vmatprep.subr.mxu0 0.0
  %146 = vmatpush1.xpose.msra.mxu0 0.0
  %147 = vmatprep.subr.mxu0 0.0
  %148 = vmatpush1.xpose.msra.mxu0 0.0
  %149 = vmatprep.subr.mxu0 0.0
  %150 = vmatpush1.xpose.msra.mxu0 0.0
  %151 = vmatprep.subr.mxu0 0.0
  %152 = vmatpush1.xpose.msra.mxu0 0.0
  %153 = vmatprep.subr.mxu0 0.0
  %154 = vmatpush1.xpose.msra.mxu0 0.0
  %155 = vmatprep.subr.mxu0 0.0
  %156 = vmatpush1.xpose.msra.mxu0 0.0
  %157 = vmatprep.subr.mxu0 0.0
  %158 = vmatpush1.xpose.msra.mxu0 0.0
  %159 = vmatprep.subr.mxu0 0.0
  %160 = vmatpush1.xpose.msra.mxu0 0.0
  %161 = vmatprep.subr.mxu0 0.0
  %162 = vmatpush1.xpose.msra.mxu0 0.0
  %163 = vmatprep.subr.mxu0 0.0
  %164 = vmatpush1.xpose.msra.mxu0 0.0
  %165 = vmatprep.subr.mxu0 0.0
  %166 = vmatpush1.xpose.msra.mxu0 0.0
  %167 = vmatprep.subr.mxu0 0.0
  %168 = vmatpush1.xpose.msra.mxu0 0.0
  %169 = vmatprep.subr.mxu0 0.0
  %170 = vmatpush1.xpose.msra.mxu0 0.0
  %171 = vmatprep.subr.mxu0 0.0
  %172 = vmatpush1.xpose.msra.mxu0 0.0
  %173 = vmatprep.subr.mxu0 0.0
  %174 = vmatpush1.xpose.msra.mxu0 0.0
  %175 = vmatprep.mubr.f32.mxu0 0.0
  %176 = vmatmul.mubr.f32.gmra.mrb[0].mxu0 %v94
  %v177 = vpop.f32.mrb[0].mxu0
  %v178 = vadd.f32 0.0, %v177
  %v179 = vpop.f32.mrb[0].mxu0
  %180 = vmatprep.mubr.f32.mxu0 0.0
  %181 = vmatmul.mubr.f32.gmra.mrb[0].mxu0 %v97
  %v182 = vpop.f32.mrb[0].mxu0
  %v183 = vadd.f32 0.0, %v182
  %v184 = vpop.f32.mrb[0].mxu0
  %185 = vdwg.mxu0
  %v186 = vadd.f32 %v86, %v178
  %v187 = vadd.f32 %v87, %v183
  %188 = vst.msk [vmem:[#allocation2] sm:$0xff] %vm92, %v186
  %189 = vst.msk [vmem:[#allocation2 + $0x8] sm:$0xff] %vm92, %v187
  %v190 = vld [vmem:[#allocation3] sm:$0xff]
  %v191 = vld [vmem:[#allocation3 + $0x8] sm:$0xff]
  %v192 = vld [vmem:[%s62] sm:$0xff]
  %v193 = vld [vmem:[%s62 + $0x8] sm:$0xff]
  %v194 = vld [vmem:[%s62 + $0x10] sm:$0xff]
  %v195 = vld [vmem:[%s62 + $0x18] sm:$0xff]
  %v197 = vsel %vm92, %v192, 0
  %v200 = vsel %vm92, %v193, 0
  %v203 = vsel %vm92, %v194, 0
  %v206 = vsel %vm92, %v195, 0
  %208 = vmatprep.subr.mxu0 0.0
  %209 = vmatpush1.xpose.msra.mxu0 %v197
  %210 = vmatprep.subr.mxu0 0.0
  %211 = vmatpush1.xpose.msra.mxu0 %v200
  %212 = vmatprep.subr.mxu0 0.0
  %213 = vmatpush1.xpose.msra.mxu0 %v203
  %214 = vmatprep.subr.mxu0 0.0
  %215 = vmatpush1.xpose.msra.mxu0 %v206
  %216 = vmatprep.subr.mxu0 0.0
  %217 = vmatpush1.xpose.msra.mxu0 0.0
  %218 = vmatprep.subr.mxu0 0.0
  %219 = vmatpush1.xpose.msra.mxu0 0.0
  %220 = vmatprep.subr.mxu0 0.0
  %221 = vmatpush1.xpose.msra.mxu0 0.0
  %222 = vmatprep.subr.mxu0 0.0
  %223 = vmatpush1.xpose.msra.mxu0 0.0
  %224 = vmatprep.subr.mxu0 0.0
  %225 = vmatpush1.xpose.msra.mxu0 0.0
  %226 = vmatprep.subr.mxu0 0.0
  %227 = vmatpush1.xpose.msra.mxu0 0.0
  %228 = vmatprep.subr.mxu0 0.0
  %229 = vmatpush1.xpose.msra.mxu0 0.0
  %230 = vmatprep.subr.mxu0 0.0
  %231 = vmatpush1.xpose.msra.mxu0 0.0
  %232 = vmatprep.subr.mxu0 0.0
  %233 = vmatpush1.xpose.msra.mxu0 0.0
  %234 = vmatprep.subr.mxu0 0.0
  %235 = vmatpush1.xpose.msra.mxu0 0.0
  %236 = vmatprep.subr.mxu0 0.0
  %237 = vmatpush1.xpose.msra.mxu0 0.0
  %238 = vmatprep.subr.mxu0 0.0
  %239 = vmatpush1.xpose.msra.mxu0 0.0
  %240 = vmatprep.subr.mxu0 0.0
  %241 = vmatpush1.xpose.msra.mxu0 0.0
  %242 = vmatprep.subr.mxu0 0.0
  %243 = vmatpush1.xpose.msra.mxu0 0.0
  %244 = vmatprep.subr.mxu0 0.0
  %245 = vmatpush1.xpose.msra.mxu0 0.0
  %246 = vmatprep.subr.mxu0 0.0
  %247 = vmatpush1.xpose.msra.mxu0 0.0
  %248 = vmatprep.subr.mxu0 0.0
  %249 = vmatpush1.xpose.msra.mxu0 0.0
  %250 = vmatprep.subr.mxu0 0.0
  %251 = vmatpush1.xpose.msra.mxu0 0.0
  %252 = vmatprep.subr.mxu0 0.0
  %253 = vmatpush1.xpose.msra.mxu0 0.0
  %254 = vmatprep.subr.mxu0 0.0
  %255 = vmatpush1.xpose.msra.mxu0 0.0
  %256 = vmatprep.subr.mxu0 0.0
  %257 = vmatpush1.xpose.msra.mxu0 0.0
  %258 = vmatprep.subr.mxu0 0.0
  %259 = vmatpush1.xpose.msra.mxu0 0.0
  %260 = vmatprep.subr.mxu0 0.0
  %261 = vmatpush1.xpose.msra.mxu0 0.0
  %262 = vmatprep.subr.mxu0 0.0
  %263 = vmatpush1.xpose.msra.mxu0 0.0
  %264 = vmatprep.subr.mxu0 0.0
  %265 = vmatpush1.xpose.msra.mxu0 0.0
  %266 = vmatprep.subr.mxu0 0.0
  %267 = vmatpush1.xpose.msra.mxu0 0.0
  %268 = vmatprep.subr.mxu0 0.0
  %269 = vmatpush1.xpose.msra.mxu0 0.0
  %270 = vmatprep.subr.mxu0 0.0
  %271 = vmatpush1.xpose.msra.mxu0 0.0
  %272 = vmatprep.mubr.f32.mxu0 0.0
  %273 = vmatmul.mubr.f32.gmra.mrb[0].mxu0 %v94
  %v274 = vpop.f32.mrb[0].mxu0
  %v275 = vadd.f32 0.0, %v274
  %v276 = vpop.f32.mrb[0].mxu0
  %277 = vmatprep.mubr.f32.mxu0 0.0
  %278 = vmatmul.mubr.f32.gmra.mrb[0].mxu0 %v97
  %v279 = vpop.f32.mrb[0].mxu0
  %v280 = vadd.f32 0.0, %v279
  %v281 = vpop.f32.mrb[0].mxu0
  %282 = vdwg.mxu0
  %v283 = vadd.f32 %v190, %v275
  %v284 = vadd.f32 %v191, %v280
  %285 = vst.msk [vmem:[#allocation3] sm:$0xff] %vm92, %v283
  %286 = vst.msk [vmem:[#allocation3 + $0x8] sm:$0xff] %vm92, %v284
  %v287 = vld [vmem:[#allocation4] sm:$0xff]
  %v288 = vld [vmem:[#allocation4 + $0x8] sm:$0xff]
  %v289 = vld [vmem:[%s70] sm:$0xff]
  %v290 = vld [vmem:[%s70 + $0x8] sm:$0xff]
  %v291 = vld [vmem:[%s70 + $0x10] sm:$0xff]
  %v292 = vld [vmem:[%s70 + $0x18] sm:$0xff]
  %v294 = vsel %vm92, %v289, 0
  %v297 = vsel %vm92, %v290, 0
  %v300 = vsel %vm92, %v291, 0
  %v303 = vsel %vm92, %v292, 0
  %305 = vmatprep.subr.mxu0 0.0
  %306 = vmatpush1.xpose.msra.mxu0 %v294
  %307 = vmatprep.subr.mxu0 0.0
  %308 = vmatpush1.xpose.msra.mxu0 %v297
  %309 = vmatprep.subr.mxu0 0.0
  %310 = vmatpush1.xpose.msra.mxu0 %v300
  %311 = vmatprep.subr.mxu0 0.0
  %312 = vmatpush1.xpose.msra.mxu0 %v303
  %313 = vmatprep.subr.mxu0 0.0
  %314 = vmatpush1.xpose.msra.mxu0 0.0
  %315 = vmatprep.subr.mxu0 0.0
  %316 = vmatpush1.xpose.msra.mxu0 0.0
  %317 = vmatprep.subr.mxu0 0.0
  %318 = vmatpush1.xpose.msra.mxu0 0.0
  %319 = vmatprep.subr.mxu0 0.0
  %320 = vmatpush1.xpose.msra.mxu0 0.0
  %321 = vmatprep.subr.mxu0 0.0
  %322 = vmatpush1.xpose.msra.mxu0 0.0
  %323 = vmatprep.subr.mxu0 0.0
  %324 = vmatpush1.xpose.msra.mxu0 0.0
  %325 = vmatprep.subr.mxu0 0.0
  %326 = vmatpush1.xpose.msra.mxu0 0.0
  %327 = vmatprep.subr.mxu0 0.0
  %328 = vmatpush1.xpose.msra.mxu0 0.0
  %329 = vmatprep.subr.mxu0 0.0
  %330 = vmatpush1.xpose.msra.mxu0 0.0
  %331 = vmatprep.subr.mxu0 0.0
  %332 = vmatpush1.xpose.msra.mxu0 0.0
  %333 = vmatprep.subr.mxu0 0.0
  %334 = vmatpush1.xpose.msra.mxu0 0.0
  %335 = vmatprep.subr.mxu0 0.0
  %336 = vmatpush1.xpose.msra.mxu0 0.0
  %337 = vmatprep.subr.mxu0 0.0
  %338 = vmatpush1.xpose.msra.mxu0 0.0
  %339 = vmatprep.subr.mxu0 0.0
  %340 = vmatpush1.xpose.msra.mxu0 0.0
  %341 = vmatprep.subr.mxu0 0.0
  %342 = vmatpush1.xpose.msra.mxu0 0.0
  %343 = vmatprep.subr.mxu0 0.0
  %344 = vmatpush1.xpose.msra.mxu0 0.0
  %345 = vmatprep.subr.mxu0 0.0
  %346 = vmatpush1.xpose.msra.mxu0 0.0
  %347 = vmatprep.subr.mxu0 0.0
  %348 = vmatpush1.xpose.msra.mxu0 0.0
  %349 = vmatprep.subr.mxu0 0.0
  %350 = vmatpush1.xpose.msra.mxu0 0.0
  %351 = vmatprep.subr.mxu0 0.0
  %352 = vmatpush1.xpose.msra.mxu0 0.0
  %353 = vmatprep.subr.mxu0 0.0
  %354 = vmatpush1.xpose.msra.mxu0 0.0
  %355 = vmatprep.subr.mxu0 0.0
  %356 = vmatpush1.xpose.msra.mxu0 0.0
  %357 = vmatprep.subr.mxu0 0.0
  %358 = vmatpush1.xpose.msra.mxu0 0.0
  %359 = vmatprep.subr.mxu0 0.0
  %360 = vmatpush1.xpose.msra.mxu0 0.0
  %361 = vmatprep.subr.mxu0 0.0
  %362 = vmatpush1.xpose.msra.mxu0 0.0
  %363 = vmatprep.subr.mxu0 0.0
  %364 = vmatpush1.xpose.msra.mxu0 0.0
  %365 = vmatprep.subr.mxu0 0.0
  %366 = vmatpush1.xpose.msra.mxu0 0.0
  %367 = vmatprep.subr.mxu0 0.0
  %368 = vmatpush1.xpose.msra.mxu0 0.0
  %369 = vmatprep.mubr.f32.mxu0 0.0
  %370 = vmatmul.mubr.f32.gmra.mrb[0].mxu0 %v94
  %v371 = vpop.f32.mrb[0].mxu0
  %v372 = vadd.f32 0.0, %v371
  %v373 = vpop.f32.mrb[0].mxu0
  %374 = vmatprep.mubr.f32.mxu0 0.0
  %375 = vmatmul.mubr.f32.gmra.mrb[0].mxu0 %v97
  %v376 = vpop.f32.mrb[0].mxu0
  %v377 = vadd.f32 0.0, %v376
  %v378 = vpop.f32.mrb[0].mxu0
  %379 = vdwg.mxu0
  %v380 = vadd.f32 %v287, %v372
  %v381 = vadd.f32 %v288, %v377
  %382 = vst.msk [vmem:[#allocation4] sm:$0xff] %vm92, %v380
  %383 = vst.msk [vmem:[#allocation4 + $0x8] sm:$0xff] %vm92, %v381
  // Predicated region
  $region34: #{deepspeed_self_attention_forward.3} parent=0 // pred_check
    %p384 = pneg %p73
  $region35: #{deepspeed_self_attention_forward.3} parent=0 // pred_check_branch
    %386 = sbr.rel (%p384) target = $region37
  $region36: #{deepspeed_self_attention_forward.3} parent=0 // pred_region
    %v387 = vld [vmem:[#allocation2] sm:$0xff]
    %v388 = vld [vmem:[#allocation2 + $0x8] sm:$0xff]
    %v389 = vld [vmem:[%s4] sm:$0x1]
    %v391 = vlaneseq
    %v392 = vshrl.u32 %v391, 7
    %v393 = vsub.s32 0, %v392
    %v394 = vrot.slane %v389, %v393
    %v396 = vadd.f32 %v387, %v394
    %v397 = vadd.f32 %v388, %v394
    %398 = vst.msk [vmem:[%s7] sm:$0xff] %vm92, %v396
    %399 = vst.msk [vmem:[%s7 + $0x8] sm:$0xff] %vm92, %v397
    %v400 = vld [vmem:[#allocation3] sm:$0xff]
    %v401 = vld [vmem:[#allocation3 + $0x8] sm:$0xff]
    %v402 = vld [vmem:[%s5] sm:$0x1]
    %v404 = vlaneseq
    %v405 = vshrl.u32 %v404, 7
    %v406 = vsub.s32 0, %v405
    %v407 = vrot.slane %v402, %v406
    %v409 = vadd.f32 %v400, %v407
    %v410 = vadd.f32 %v401, %v407
    %411 = vst.msk [vmem:[%s8] sm:$0xff] %vm92, %v409
    %412 = vst.msk [vmem:[%s8 + $0x8] sm:$0xff] %vm92, %v410
    %v413 = vld [vmem:[#allocation4] sm:$0xff]
    %v414 = vld [vmem:[#allocation4 + $0x8] sm:$0xff]
    %v415 = vld [vmem:[%s6] sm:$0x1]
    %v417 = vlaneseq
    %v418 = vshrl.u32 %v417, 7
    %v419 = vsub.s32 0, %v418
    %v420 = vrot.slane %v415, %v419
    %v422 = vadd.f32 %v413, %v420
    %v423 = vadd.f32 %v414, %v420
    %424 = vst.msk [vmem:[%s9] sm:$0xff] %vm92, %v422
    %425 = vst.msk [vmem:[%s9 + $0x8] sm:$0xff] %vm92, %v423
  $region37: #{deepspeed_self_attention_forward.3} parent=0 // pred_fallthru
    _
  // Predicated region
  $region38: #{deepspeed_self_attention_forward.3} parent=0 // pred_check
    _
  $region39: #{deepspeed_self_attention_forward.3} parent=0 // pred_check_branch
    %427 = sbr.rel (0) target = $region41
  $region40: #{deepspeed_self_attention_forward.3} parent=0 // pred_region
    _
  $region41: #{deepspeed_self_attention_forward.3} parent=0 // pred_fallthru
    _
  // Predicated region
  $region42: #{deepspeed_self_attention_forward.3} parent=0 // pred_check
    _
  $region43: #{deepspeed_self_attention_forward.3} parent=0 // pred_check_branch
    %429 = sbr.rel (0) target = $region45
  $region44: #{deepspeed_self_attention_forward.3} parent=0 // pred_region
    _
  $region45: #{deepspeed_self_attention_forward.3} parent=0 // pred_fallthru
    _
  // Predicated region
  $region46: #{deepspeed_self_attention_forward.3} parent=0 // pred_check
    _
  $region47: #{deepspeed_self_attention_forward.3} parent=0 // pred_check_branch
    %431 = sbr.rel (0) target = $region49
  $region48: #{deepspeed_self_attention_forward.3} parent=0 // pred_region
    _
  $region49: #{deepspeed_self_attention_forward.3} parent=0 // pred_fallthru
    _
  // Predicated region
  $region50: #{deepspeed_self_attention_forward.3} parent=0 // pred_check
    _
  $region51: #{deepspeed_self_attention_forward.3} parent=0 // pred_check_branch
    %433 = sbr.rel (0) target = $region53
  $region52: #{deepspeed_self_attention_forward.3} parent=0 // pred_region
    _
  $region53: #{deepspeed_self_attention_forward.3} parent=0 // pred_fallthru
    _
  // Predicated region
  $region54: #{deepspeed_self_attention_forward.3} parent=0 // pred_check
    _
  $region55: #{deepspeed_self_attention_forward.3} parent=0 // pred_check_branch
    %435 = sbr.rel (0) target = $region57
  $region56: #{deepspeed_self_attention_forward.3} parent=0 // pred_region
    _
  $region57: #{deepspeed_self_attention_forward.3} parent=0 // pred_fallthru
    _
  // Predicated region
  $region58: #{deepspeed_self_attention_forward.3} parent=0 // pred_check
    _
  $region59: #{deepspeed_self_attention_forward.3} parent=0 // pred_check_branch
    %437 = sbr.rel (0) target = $region61
  $region60: #{deepspeed_self_attention_forward.3} parent=0 // pred_region
    _
  $region61: #{deepspeed_self_attention_forward.3} parent=0 // pred_fallthru
    _

// kernel: deepspeed_self_attention_forward.4
$region0: #{deepspeed_self_attention_forward.4}
  #allocation0 [shape = 'u32[]', space=smem, size = 0x4, offset = 0x4, fixed_abs, tag = 'smem constant byte address 0x4 - core index']
  #allocation1 [shape = 'u32[144,128]{1,0:T(1,128)}', space=vmem, size = 0x12000, scoped, tag = 'internal scratch']
  #allocation2 [shape = 'f32[4,8,1]{2,1,0:T(8,128)}', space=vmem, size = 0x4000, scoped, tag = 'scratch operand']
  #allocation3 [shape = 'f32[4,8,1]{2,1,0:T(8,128)}', space=vmem, size = 0x4000, scoped, tag = 'scratch operand']
  #allocation4 [shape = 'f32[4,8,8]{2,1,0:T(8,128)}', space=vmem, size = 0x4000, scoped, tag = 'scratch operand']
  %s0 = inlined_call_operand.vmem [shape: f32[2,8,32], index: 0, kind: input, shape index: {}]
  %s1 = inlined_call_operand.vmem [shape: f32[2,8,32], index: 1, kind: input, shape index: {}]
  %s2 = inlined_call_operand.vmem [shape: f32[2,8,32], index: 2, kind: input, shape index: {}]
  %s3 = inlined_call_operand.vmem [shape: f32[2,1,1,8], index: 3, kind: input, shape index: {}]
  %s4 = inlined_call_operand.vmem [shape: f32[2,8,32], index: 4, kind: output, shape index: {}]
  %s5 = sld [smem:[#allocation0]]
  $region57: #{deepspeed_self_attention_forward.4} parent=0
    _
  %s7 = ssub.s32 1, %s5
  %s8 = scalar_select 0, %s7, %s5
  loop: start=0, step=1, limit=4
  $region2: #{deepspeed_self_attention_forward.4} parent=0 // loop_pre_header
    _
  $region3: #{deepspeed_self_attention_forward.4} parent=0 // loop_header
    %s10 = sphi 0, %s14
    %p11 = scmp.ge.s32.totalorder %s10, 4
    %s17 = sphi 0, %s36
    %s18 = sphi 0, %s32
    %s19 = sphi 0, %s28
    %s20 = sphi 0, %s17
    %s21 = sphi 0, %s18
    %s22 = sphi 0, %s19
    %s23 = sphi 0, %s20
    %s24 = sphi 0, %s21
    %s25 = sphi 0, %s22
    %s41 = sphi 0, %s43
    %s44 = sphi 0, %s41
    %s45 = sphi 0, %s44
    %s61 = sphi 0, %s45
    %s69 = sphi 0, %s71
    %s72 = sphi 0, %s69
    %s73 = sphi 0, %s72
    %s89 = sphi 0, %s73
    %s97 = sphi 0, %s99
    %s100 = sphi 0, %s97
    %s101 = sphi 0, %s100
    %s117 = sphi 0, %s101
    %s125 = sphi 0, %s127
    %s128 = sphi 0, %s125
    %s129 = sphi 0, %s128
    %s145 = sphi 0, %s129
    %s153 = sphi 0, %s155
    %s156 = sphi 0, %s153
    %s157 = sphi 0, %s156
    %s173 = sphi 0, %s157
  $region4: #{deepspeed_self_attention_forward.4} parent=0 // loop_header_branch
    %13 = sbr.rel (%p11) target = $region8
  $region5: #{deepspeed_self_attention_forward.4} parent=0 // loop_body
    %s15 = ssub.s32 %s10, 1
    %s16 = ssub.s32 %s10, 2
    %s26 = sadd.s32 1, %s19
    %p27 = scmp.ge.s32.totalorder %s26, 1
    %s28 = scalar_select %p27, 0, %s26
    %s29 = sadd.s32 1, %s18
    %s30 = scalar_select %p27, %s29, %s18
    %p31 = scmp.ge.s32.totalorder %s30, 1
    %s32 = scalar_select %p31, 0, %s30
    %s33 = sadd.s32 1, %s17
    %s34 = scalar_select %p31, %s33, %s17
    %p35 = scmp.ge.s32.totalorder %s34, 2
    %s36 = scalar_select %p35, 0, %s34
    %s37 = ssub.s32 %s17, %s36
    %s38 = ssub.s32 %s18, %s32
    %s39 = sor.u32 %s37, %s38
    %p40 = scmp.eq.s32.totalorder %s39, 0
    %s42 = sadd.s32 %s41, 1
    %s43 = scalar_select %p40, %s41, %s42
    %p46 = pneg %p40
    %p47 = scmp.eq.s32.totalorder %s10, 1
    %p48 = por %p46, %p47
    %p49 = scmp.ne.s32.totalorder %s41, %s44
    %p50 = scmp.eq.s32.totalorder %s10, 0
    %p51 = por %p49, %p50
    %p52 = scmp.ne.s32.totalorder %s41, %s44
    %p53 = scmp.eq.s32.totalorder %s15, 1
    %p54 = por %p52, %p53
    %p55 = scmp.ne.s32.totalorder %s44, %s45
    %p56 = scmp.eq.s32.totalorder %s15, 0
    %p57 = por %p55, %p56
    %p58 = scmp.ne.s32.totalorder %s44, %s45
    %p59 = scmp.eq.s32.totalorder %s16, 1
    %p60 = por %p58, %p59
    %p62 = scmp.ne.s32.totalorder %s45, %s61
    %p63 = scmp.eq.s32.totalorder %s16, 0
    %p64 = por %p62, %p63
    %s65 = ssub.s32 %s17, %s36
    %s66 = ssub.s32 %s19, %s28
    %s67 = sor.u32 %s65, %s66
    %p68 = scmp.eq.s32.totalorder %s67, 0
    %s70 = sadd.s32 %s69, 1
    %s71 = scalar_select %p68, %s69, %s70
    %p74 = pneg %p68
    %p75 = scmp.eq.s32.totalorder %s10, 1
    %p76 = por %p74, %p75
    %p77 = scmp.ne.s32.totalorder %s69, %s72
    %p78 = scmp.eq.s32.totalorder %s10, 0
    %p79 = por %p77, %p78
    %p80 = scmp.ne.s32.totalorder %s69, %s72
    %p81 = scmp.eq.s32.totalorder %s15, 1
    %p82 = por %p80, %p81
    %p83 = scmp.ne.s32.totalorder %s72, %s73
    %p84 = scmp.eq.s32.totalorder %s15, 0
    %p85 = por %p83, %p84
    %p86 = scmp.ne.s32.totalorder %s72, %s73
    %p87 = scmp.eq.s32.totalorder %s16, 1
    %p88 = por %p86, %p87
    %p90 = scmp.ne.s32.totalorder %s73, %s89
    %p91 = scmp.eq.s32.totalorder %s16, 0
    %p92 = por %p90, %p91
    %s93 = ssub.s32 %s17, %s36
    %s94 = ssub.s32 %s19, %s28
    %s95 = sor.u32 %s93, %s94
    %p96 = scmp.eq.s32.totalorder %s95, 0
    %s98 = sadd.s32 %s97, 1
    %s99 = scalar_select %p96, %s97, %s98
    %p102 = pneg %p96
    %p103 = scmp.eq.s32.totalorder %s10, 1
    %p104 = por %p102, %p103
    %p105 = scmp.ne.s32.totalorder %s97, %s100
    %p106 = scmp.eq.s32.totalorder %s10, 0
    %p107 = por %p105, %p106
    %p108 = scmp.ne.s32.totalorder %s97, %s100
    %p109 = scmp.eq.s32.totalorder %s15, 1
    %p110 = por %p108, %p109
    %p111 = scmp.ne.s32.totalorder %s100, %s101
    %p112 = scmp.eq.s32.totalorder %s15, 0
    %p113 = por %p111, %p112
    %p114 = scmp.ne.s32.totalorder %s100, %s101
    %p115 = scmp.eq.s32.totalorder %s16, 1
    %p116 = por %p114, %p115
    %p118 = scmp.ne.s32.totalorder %s101, %s117
    %p119 = scmp.eq.s32.totalorder %s16, 0
    %p120 = por %p118, %p119
    %s121 = ssub.s32 %s17, %s36
    %s122 = ssub.s32 %s19, %s28
    %s123 = sor.u32 %s121, %s122
    %p124 = scmp.eq.s32.totalorder %s123, 0
    %s126 = sadd.s32 %s125, 1
    %s127 = scalar_select %p124, %s125, %s126
    %p130 = pneg %p124
    %p131 = scmp.eq.s32.totalorder %s10, 1
    %p132 = por %p130, %p131
    %p133 = scmp.ne.s32.totalorder %s125, %s128
    %p134 = scmp.eq.s32.totalorder %s10, 0
    %p135 = por %p133, %p134
    %p136 = scmp.ne.s32.totalorder %s125, %s128
    %p137 = scmp.eq.s32.totalorder %s15, 1
    %p138 = por %p136, %p137
    %p139 = scmp.ne.s32.totalorder %s128, %s129
    %p140 = scmp.eq.s32.totalorder %s15, 0
    %p141 = por %p139, %p140
    %p142 = scmp.ne.s32.totalorder %s128, %s129
    %p143 = scmp.eq.s32.totalorder %s16, 1
    %p144 = por %p142, %p143
    %p146 = scmp.ne.s32.totalorder %s129, %s145
    %p147 = scmp.eq.s32.totalorder %s16, 0
    %p148 = por %p146, %p147
    %s149 = ssub.s32 %s17, %s36
    %s150 = ssub.s32 %s18, %s32
    %s151 = sor.u32 %s149, %s150
    %p152 = scmp.eq.s32.totalorder %s151, 0
    %s154 = sadd.s32 %s153, 1
    %s155 = scalar_select %p152, %s153, %s154
    %p158 = pneg %p152
    %p159 = scmp.eq.s32.totalorder %s10, 1
    %p160 = por %p158, %p159
    %p161 = scmp.ne.s32.totalorder %s153, %s156
    %p162 = scmp.eq.s32.totalorder %s10, 0
    %p163 = por %p161, %p162
    %p164 = scmp.ne.s32.totalorder %s153, %s156
    %p165 = scmp.eq.s32.totalorder %s15, 1
    %p166 = por %p164, %p165
    %p167 = scmp.ne.s32.totalorder %s156, %s157
    %p168 = scmp.eq.s32.totalorder %s15, 0
    %p169 = por %p167, %p168
    %p170 = scmp.ne.s32.totalorder %s156, %s157
    %p171 = scmp.eq.s32.totalorder %s16, 1
    %p172 = por %p170, %p171
    %p174 = scmp.ne.s32.totalorder %s157, %s173
    %p175 = scmp.eq.s32.totalorder %s16, 0
    %p176 = por %p174, %p175
    %p177 = scmp.le.s32.totalorder 1, %s10
    %p178 = scmp.lt.s32.totalorder %s10, 3
    %p179 = pnand %p177, %p178
    %p180 = pneg %p179
    // Predicated region
    $region9: #{deepspeed_self_attention_forward.4} parent=5 // pred_check
      _
    $region10: #{deepspeed_self_attention_forward.4} parent=5 // pred_check_branch
      %182 = sbr.rel (%p179) target = $region12
    $region11: #{deepspeed_self_attention_forward.4} parent=5 // pred_region
      %s183 = ssub.s32 %s10, 1
    $region12: #{deepspeed_self_attention_forward.4} parent=5 // pred_fallthru
      _
    %p184 = scmp.lt.s32.totalorder %s10, 2
    // Predicated region
    $region13: #{deepspeed_self_attention_forward.4} parent=5 // pred_check
      %p185 = pneg %p184
    $region14: #{deepspeed_self_attention_forward.4} parent=5 // pred_check_branch
      %187 = sbr.rel (%p185) target = $region16
    $region15: #{deepspeed_self_attention_forward.4} parent=5 // pred_region
      // Predicated region
      $region17: #{deepspeed_self_attention_forward.4} parent=15 // pred_check
        %p188 = pneg %p51
      $region18: #{deepspeed_self_attention_forward.4} parent=15 // pred_check_branch
        %190 = sbr.rel (%p188) target = $region20
      $region19: #{deepspeed_self_attention_forward.4} parent=15 // pred_region
        %p191 = scmp.lt.s32.totalorder %s17, 1
        %s192 = scalar_select %p191, %s17, 1
        %p193 = scmp.lt.s32.totalorder %s18, 0
        %s194 = scalar_select %p193, %s18, 0
        %s195 = sadd.s32 %s194, %s192
        %s196 = smul.addr %s195, 8
        %s197 = scalar_lea.vmem %s0, %s196
      $region20: #{deepspeed_self_attention_forward.4} parent=15 // pred_fallthru
        _
      // Predicated region
      $region21: #{deepspeed_self_attention_forward.4} parent=15 // pred_check
        %p198 = pneg %p79
      $region22: #{deepspeed_self_attention_forward.4} parent=15 // pred_check_branch
        %200 = sbr.rel (%p198) target = $region24
      $region23: #{deepspeed_self_attention_forward.4} parent=15 // pred_region
        %p201 = scmp.lt.s32.totalorder %s17, 1
        %s202 = scalar_select %p201, %s17, 1
        %p203 = scmp.lt.s32.totalorder %s19, 0
        %s204 = scalar_select %p203, %s19, 0
        %s205 = sadd.s32 %s204, %s202
        %s206 = smul.addr %s205, 8
        %s207 = scalar_lea.vmem %s1, %s206
      $region24: #{deepspeed_self_attention_forward.4} parent=15 // pred_fallthru
        _
      // Predicated region
      $region25: #{deepspeed_self_attention_forward.4} parent=15 // pred_check
        %p208 = pneg %p107
      $region26: #{deepspeed_self_attention_forward.4} parent=15 // pred_check_branch
        %210 = sbr.rel (%p208) target = $region28
      $region27: #{deepspeed_self_attention_forward.4} parent=15 // pred_region
        %p211 = scmp.lt.s32.totalorder %s17, 1
        %s212 = scalar_select %p211, %s17, 1
        %p213 = scmp.lt.s32.totalorder %s19, 0
        %s214 = scalar_select %p213, %s19, 0
        %s215 = sadd.s32 %s214, %s212
        %s216 = smul.addr %s215, 8
        %s217 = scalar_lea.vmem %s2, %s216
      $region28: #{deepspeed_self_attention_forward.4} parent=15 // pred_fallthru
        _
      // Predicated region
      $region29: #{deepspeed_self_attention_forward.4} parent=15 // pred_check
        %p218 = pneg %p135
      $region30: #{deepspeed_self_attention_forward.4} parent=15 // pred_check_branch
        %220 = sbr.rel (%p218) target = $region32
      $region31: #{deepspeed_self_attention_forward.4} parent=15 // pred_region
        %p221 = scmp.lt.s32.totalorder %s17, 1
        %s222 = scalar_select %p221, %s17, 1
        %p223 = scmp.lt.s32.totalorder %s19, 0
        %s224 = scalar_select %p223, %s19, 0
        %s225 = sadd.s32 %s224, %s222
        %s226 = scalar_lea.vmem %s3, %s225
      $region32: #{deepspeed_self_attention_forward.4} parent=15 // pred_fallthru
        _
    $region16: #{deepspeed_self_attention_forward.4} parent=5 // pred_fallthru
      _
    %p227 = scmp.le.s32.totalorder 1, %s10
    %p228 = scmp.lt.s32.totalorder %s10, 3
    %p229 = pnand %p227, %p228
    %p230 = pneg %p229
    // Predicated region
    $region33: #{deepspeed_self_attention_forward.4} parent=5 // pred_check
      _
    $region34: #{deepspeed_self_attention_forward.4} parent=5 // pred_check_branch
      %232 = sbr.rel (%p229) target = $region36
    $region35: #{deepspeed_self_attention_forward.4} parent=5 // pred_region
      %s233 = ssub.s32 %s10, 1
      %p234 = scmp.lt.s32.totalorder %s20, 1
      %s235 = scalar_select %p234, %s20, 1
      %p236 = scmp.lt.s32.totalorder %s21, 0
      %s237 = scalar_select %p236, %s21, 0
      %s238 = sadd.s32 %s237, %s235
      %s239 = smul.addr %s238, 8
      %s240 = scalar_lea.vmem %s0, %s239
      %p241 = pneg %p57
      %p242 = pneg %p54
      %p243 = scmp.lt.s32.totalorder %s20, 1
      %s244 = scalar_select %p243, %s20, 1
      %p245 = scmp.lt.s32.totalorder %s22, 0
      %s246 = scalar_select %p245, %s22, 0
      %s247 = sadd.s32 %s246, %s244
      %s248 = smul.addr %s247, 8
      %s249 = scalar_lea.vmem %s1, %s248
      %p250 = pneg %p85
      %p251 = pneg %p82
      %p252 = scmp.lt.s32.totalorder %s20, 1
      %s253 = scalar_select %p252, %s20, 1
      %p254 = scmp.lt.s32.totalorder %s22, 0
      %s255 = scalar_select %p254, %s22, 0
      %s256 = sadd.s32 %s255, %s253
      %s257 = smul.addr %s256, 8
      %s258 = scalar_lea.vmem %s2, %s257
      %p259 = pneg %p113
      %p260 = pneg %p110
      %p261 = scmp.lt.s32.totalorder %s20, 1
      %s262 = scalar_select %p261, %s20, 1
      %p263 = scmp.lt.s32.totalorder %s22, 0
      %s264 = scalar_select %p263, %s22, 0
      %s265 = sadd.s32 %s264, %s262
      %s266 = scalar_lea.vmem %s3, %s265
      %p267 = pneg %p141
      %p268 = pneg %p138
      %p269 = pneg %p169
      %p270 = pneg %p166
      %p271 = scmp.lt.s32.totalorder %s20, 1
      %s272 = scalar_select %p271, %s20, 1
      %p273 = scmp.lt.s32.totalorder %s21, 0
      %s274 = scalar_select %p273, %s21, 0
      %s275 = sadd.s32 %s274, %s272
      %s276 = smul.addr %s275, 8
      %s277 = scalar_lea.vmem %s4, %s276
      %p278 = scmp.lt.s32.totalorder %s20, 1
      %s279 = scalar_select %p278, %s20, 1
      %p280 = scmp.lt.s32.totalorder %s21, 0
      %s281 = scalar_select %p280, %s21, 0
      %s282 = sadd.s32 %s281, %s279
      %s283 = smul.addr %s282, 8
      %s284 = scalar_lea.vmem %s0, %s283
      %p285 = scmp.lt.s32.totalorder %s20, 1
      %s286 = scalar_select %p285, %s20, 1
      %p287 = scmp.lt.s32.totalorder %s22, 0
      %s288 = scalar_select %p287, %s22, 0
      %s289 = sadd.s32 %s288, %s286
      %s290 = smul.addr %s289, 8
      %s291 = scalar_lea.vmem %s1, %s290
      %p292 = scmp.lt.s32.totalorder %s20, 1
      %s293 = scalar_select %p292, %s20, 1
      %p294 = scmp.lt.s32.totalorder %s22, 0
      %s295 = scalar_select %p294, %s22, 0
      %s296 = sadd.s32 %s295, %s293
      %s297 = smul.addr %s296, 8
      %s298 = scalar_lea.vmem %s2, %s297
      %p299 = scmp.lt.s32.totalorder %s20, 1
      %s300 = scalar_select %p299, %s20, 1
      %p301 = scmp.lt.s32.totalorder %s22, 0
      %s302 = scalar_select %p301, %s22, 0
      %s303 = sadd.s32 %s302, %s300
      %s304 = scalar_lea.vmem %s3, %s303
      %p305 = scmp.lt.s32.totalorder %s20, 1
      %s306 = scalar_select %p305, %s20, 1
      %p307 = scmp.lt.s32.totalorder %s21, 0
      %s308 = scalar_select %p307, %s21, 0
      %s309 = sadd.s32 %s308, %s306
      %s310 = smul.addr %s309, 8
      %s311 = scalar_lea.vmem %s4, %s310
      %p312 = scmp.eq.s32.totalorder %s22, 0
      // Predicated region
      $region37: #{deepspeed_self_attention_forward.4} parent=35 // pred_check
        %p313 = pneg %p312
      $region38: #{deepspeed_self_attention_forward.4} parent=35 // pred_check_branch
        %315 = sbr.rel (%p313) target = $region40
      $region39: #{deepspeed_self_attention_forward.4} parent=35 // pred_region
        %vm316 = vcmask 7168
        %317 = vst.msk [vmem:[#allocation2] sm:$0xff] %vm316, -inf
        %318 = vst.msk [vmem:[#allocation2 + $0x8] sm:$0xff] %vm316, -inf
        %319 = vst.msk [vmem:[#allocation2 + $0x10] sm:$0xff] %vm316, -inf
        %320 = vst.msk [vmem:[#allocation2 + $0x18] sm:$0xff] %vm316, -inf
        %321 = vst.msk [vmem:[#allocation3] sm:$0xff] %vm316, 0.0
        %322 = vst.msk [vmem:[#allocation3 + $0x8] sm:$0xff] %vm316, 0.0
        %323 = vst.msk [vmem:[#allocation3 + $0x10] sm:$0xff] %vm316, 0.0
        %324 = vst.msk [vmem:[#allocation3 + $0x18] sm:$0xff] %vm316, 0.0
        %vm325 = vcmask 64512
        %326 = vst.msk [vmem:[#allocation4] sm:$0xff] %vm325, 0.0
        %327 = vst.msk [vmem:[#allocation4 + $0x8] sm:$0xff] %vm325, 0.0
        %328 = vst.msk [vmem:[#allocation4 + $0x10] sm:$0xff] %vm325, 0.0
        %329 = vst.msk [vmem:[#allocation4 + $0x18] sm:$0xff] %vm325, 0.0
      $region40: #{deepspeed_self_attention_forward.4} parent=35 // pred_fallthru
        _
      %v330 = vld [vmem:[%s284] sm:$0xff]
      %v331 = vmul.f32 %v330, 0.35355338
      %v332 = vld [vmem:[%s291] sm:$0xff]
      %v333 = vld [vmem:[%s298] sm:$0xff]
      %v334 = vld [vmem:[%s304] sm:$0x1]
      %v336 = vlaneseq
      %v337 = vshrl.u32 %v336, 7
      %v338 = vsub.s32 0, %v337
      %v339 = vrot.slane %v334, %v338
      %vm341 = vcmask 64512
      %v343 = vsel %vm341, %v331, 0
      %v346 = vsel %vm341, %v332, 0
      %348 = vmatprep.subr.mxu0 0.0
      %349 = vmatpush1.xpose.msra.mxu0 %v346
      %350 = vmatprep.subr.mxu0 0.0
      %351 = vmatpush1.xpose.msra.mxu0 0.0
      %352 = vmatprep.subr.mxu0 0.0
      %353 = vmatpush1.xpose.msra.mxu0 0.0
      %354 = vmatprep.subr.mxu0 0.0
      %355 = vmatpush1.xpose.msra.mxu0 0.0
      %356 = vmatprep.subr.mxu0 0.0
      %357 = vmatpush1.xpose.msra.mxu0 0.0
      %358 = vmatprep.subr.mxu0 0.0
      %359 = vmatpush1.xpose.msra.mxu0 0.0
      %360 = vmatprep.subr.mxu0 0.0
      %361 = vmatpush1.xpose.msra.mxu0 0.0
      %362 = vmatprep.subr.mxu0 0.0
      %363 = vmatpush1.xpose.msra.mxu0 0.0
      %364 = vmatprep.subr.mxu0 0.0
      %365 = vmatpush1.xpose.msra.mxu0 0.0
      %366 = vmatprep.subr.mxu0 0.0
      %367 = vmatpush1.xpose.msra.mxu0 0.0
      %368 = vmatprep.subr.mxu0 0.0
      %369 = vmatpush1.xpose.msra.mxu0 0.0
      %370 = vmatprep.subr.mxu0 0.0
      %371 = vmatpush1.xpose.msra.mxu0 0.0
      %372 = vmatprep.subr.mxu0 0.0
      %373 = vmatpush1.xpose.msra.mxu0 0.0
      %374 = vmatprep.subr.mxu0 0.0
      %375 = vmatpush1.xpose.msra.mxu0 0.0
      %376 = vmatprep.subr.mxu0 0.0
      %377 = vmatpush1.xpose.msra.mxu0 0.0
      %378 = vmatprep.subr.mxu0 0.0
      %379 = vmatpush1.xpose.msra.mxu0 0.0
      %380 = vmatprep.subr.mxu0 0.0
      %381 = vmatpush1.xpose.msra.mxu0 0.0
      %382 = vmatprep.subr.mxu0 0.0
      %383 = vmatpush1.xpose.msra.mxu0 0.0
      %384 = vmatprep.subr.mxu0 0.0
      %385 = vmatpush1.xpose.msra.mxu0 0.0
      %386 = vmatprep.subr.mxu0 0.0
      %387 = vmatpush1.xpose.msra.mxu0 0.0
      %388 = vmatprep.subr.mxu0 0.0
      %389 = vmatpush1.xpose.msra.mxu0 0.0
      %390 = vmatprep.subr.mxu0 0.0
      %391 = vmatpush1.xpose.msra.mxu0 0.0
      %392 = vmatprep.subr.mxu0 0.0
      %393 = vmatpush1.xpose.msra.mxu0 0.0
      %394 = vmatprep.subr.mxu0 0.0
      %395 = vmatpush1.xpose.msra.mxu0 0.0
      %396 = vmatprep.subr.mxu0 0.0
      %397 = vmatpush1.xpose.msra.mxu0 0.0
      %398 = vmatprep.subr.mxu0 0.0
      %399 = vmatpush1.xpose.msra.mxu0 0.0
      %400 = vmatprep.subr.mxu0 0.0
      %401 = vmatpush1.xpose.msra.mxu0 0.0
      %402 = vmatprep.subr.mxu0 0.0
      %403 = vmatpush1.xpose.msra.mxu0 0.0
      %404 = vmatprep.subr.mxu0 0.0
      %405 = vmatpush1.xpose.msra.mxu0 0.0
      %406 = vmatprep.subr.mxu0 0.0
      %407 = vmatpush1.xpose.msra.mxu0 0.0
      %408 = vmatprep.subr.mxu0 0.0
      %409 = vmatpush1.xpose.msra.mxu0 0.0
      %410 = vmatprep.subr.mxu0 0.0
      %411 = vmatpush1.xpose.msra.mxu0 0.0
      %412 = vmatprep.mubr.f32.mxu0 0.0
      %413 = vmatmul.mubr.f32.gmra.mrb[0].mxu0 %v343
      %v414 = vpop.f32.mrb[0].mxu0
      %v415 = vadd.f32 %v339, %v414
      %v416 = vpop.f32.mrb[0].mxu0
      %417 = vdwg.mxu0
      %v418 = vld [vmem:[#allocation2] sm:$0xff]
      %v419 = vsel %vm341, %v415, -inf
      %420 = vmax.xlane.f32.xlu0 %v419
      %v421 = vpop.xlane.xlu0 %420
      %v422 = vmax.f32 %v418, %v421
      %v423 = vsub.f32 %v418, %v422
      %v424 = vmul.f32 %v423, 1.442695
      %v425 = vpow.pop %v424
      %427 = vset.pattern.permute.xlu0 0
      %428 = vperm.xlu0 %427, %v422
      %v429 = vpop.permute.xlu0 %428
      %v431 = vsub.f32 %v415, %v429
      %v432 = vmul.f32 %v431, 1.442695
      %v433 = vpow.pop %v432
      %v434 = vld [vmem:[#allocation3] sm:$0xff]
      %v435 = vmul.f32 %v425, %v434
      %v436 = vsel %vm341, %v433, 0.0
      %437 = vadd.xlane.f32.xlu0 %v436
      %v438 = vpop.xlane.xlu0 %437
      %v439 = vadd.f32 %v435, %v438
      %vm440 = vcmask 7168
      %441 = vst.msk [vmem:[#allocation3] sm:$0xff] %vm440, %v439
      %v442 = vld [vmem:[#allocation4] sm:$0xff]
      %444 = vset.pattern.permute.xlu0 0
      %445 = vperm.xlu0 %444, %v425
      %v446 = vpop.permute.xlu0 %445
      %v448 = vmul.f32 %v446, %v442
      %v450 = vsel %vm341, %v433, 0
      %452 = vmatprep.subr.mxu0 0.0
      %453 = vmatpush1.msra.mxu0 %v333
      %454 = vmatprep.subr.mxu0 0.0
      %455 = vmatpush1.msra.mxu0 0.0
      %456 = vmatprep.subr.mxu0 0.0
      %457 = vmatpush1.msra.mxu0 0.0
      %458 = vmatprep.subr.mxu0 0.0
      %459 = vmatpush1.msra.mxu0 0.0
      %460 = vmatprep.subr.mxu0 0.0
      %461 = vmatpush1.msra.mxu0 0.0
      %462 = vmatprep.subr.mxu0 0.0
      %463 = vmatpush1.msra.mxu0 0.0
      %464 = vmatprep.subr.mxu0 0.0
      %465 = vmatpush1.msra.mxu0 0.0
      %466 = vmatprep.subr.mxu0 0.0
      %467 = vmatpush1.msra.mxu0 0.0
      %468 = vmatprep.subr.mxu0 0.0
      %469 = vmatpush1.msra.mxu0 0.0
      %470 = vmatprep.subr.mxu0 0.0
      %471 = vmatpush1.msra.mxu0 0.0
      %472 = vmatprep.subr.mxu0 0.0
      %473 = vmatpush1.msra.mxu0 0.0
      %474 = vmatprep.subr.mxu0 0.0
      %475 = vmatpush1.msra.mxu0 0.0
      %476 = vmatprep.subr.mxu0 0.0
      %477 = vmatpush1.msra.mxu0 0.0
      %478 = vmatprep.subr.mxu0 0.0
      %479 = vmatpush1.msra.mxu0 0.0
      %480 = vmatprep.subr.mxu0 0.0
      %481 = vmatpush1.msra.mxu0 0.0
      %482 = vmatprep.subr.mxu0 0.0
      %483 = vmatpush1.msra.mxu0 0.0
      %484 = vmatprep.subr.mxu0 0.0
      %485 = vmatpush1.msra.mxu0 0.0
      %486 = vmatprep.subr.mxu0 0.0
      %487 = vmatpush1.msra.mxu0 0.0
      %488 = vmatprep.subr.mxu0 0.0
      %489 = vmatpush1.msra.mxu0 0.0
      %490 = vmatprep.subr.mxu0 0.0
      %491 = vmatpush1.msra.mxu0 0.0
      %492 = vmatprep.subr.mxu0 0.0
      %493 = vmatpush1.msra.mxu0 0.0
      %494 = vmatprep.subr.mxu0 0.0
      %495 = vmatpush1.msra.mxu0 0.0
      %496 = vmatprep.subr.mxu0 0.0
      %497 = vmatpush1.msra.mxu0 0.0
      %498 = vmatprep.subr.mxu0 0.0
      %499 = vmatpush1.msra.mxu0 0.0
      %500 = vmatprep.subr.mxu0 0.0
      %501 = vmatpush1.msra.mxu0 0.0
      %502 = vmatprep.subr.mxu0 0.0
      %503 = vmatpush1.msra.mxu0 0.0
      %504 = vmatprep.subr.mxu0 0.0
      %505 = vmatpush1.msra.mxu0 0.0
      %506 = vmatprep.subr.mxu0 0.0
      %507 = vmatpush1.msra.mxu0 0.0
      %508 = vmatprep.subr.mxu0 0.0
      %509 = vmatpush1.msra.mxu0 0.0
      %510 = vmatprep.subr.mxu0 0.0
      %511 = vmatpush1.msra.mxu0 0.0
      %512 = vmatprep.subr.mxu0 0.0
      %513 = vmatpush1.msra.mxu0 0.0
      %514 = vmatprep.subr.mxu0 0.0
      %515 = vmatpush1.msra.mxu0 0.0
      %516 = vmatprep.mubr.f32.mxu0 0.0
      %517 = vmatmul.mubr.f32.gmra.mrb[0].mxu0 %v450
      %v518 = vpop.f32.mrb[0].mxu0
      %v519 = vadd.f32 0.0, %v518
      %v520 = vpop.f32.mrb[0].mxu0
      %521 = vdwg.mxu0
      %v522 = vadd.f32 %v448, %v519
      %523 = vst.msk [vmem:[#allocation4] sm:$0xff] %vm341, %v522
      %524 = vst.msk [vmem:[#allocation2] sm:$0xff] %vm440, %v422
      %525 = vrot.lane.b32.xlu0 %v331, 120
      %v526 = vpop.permute.xlu0 %525
      %527 = vrot.lane.b32.xlu0 %v332, 120
      %v528 = vpop.permute.xlu0 %527
      %v529 = vsel %vm341, %v526, 0
      %v531 = vsel %vm341, %v528, 0
      %533 = vmatprep.subr.mxu0 0.0
      %534 = vmatpush1.xpose.msra.mxu0 %v531
      %535 = vmatprep.subr.mxu0 0.0
      %536 = vmatpush1.xpose.msra.mxu0 0.0
      %537 = vmatprep.subr.mxu0 0.0
      %538 = vmatpush1.xpose.msra.mxu0 0.0
      %539 = vmatprep.subr.mxu0 0.0
      %540 = vmatpush1.xpose.msra.mxu0 0.0
      %541 = vmatprep.subr.mxu0 0.0
      %542 = vmatpush1.xpose.msra.mxu0 0.0
      %543 = vmatprep.subr.mxu0 0.0
      %544 = vmatpush1.xpose.msra.mxu0 0.0
      %545 = vmatprep.subr.mxu0 0.0
      %546 = vmatpush1.xpose.msra.mxu0 0.0
      %547 = vmatprep.subr.mxu0 0.0
      %548 = vmatpush1.xpose.msra.mxu0 0.0
      %549 = vmatprep.subr.mxu0 0.0
      %550 = vmatpush1.xpose.msra.mxu0 0.0
      %551 = vmatprep.subr.mxu0 0.0
      %552 = vmatpush1.xpose.msra.mxu0 0.0
      %553 = vmatprep.subr.mxu0 0.0
      %554 = vmatpush1.xpose.msra.mxu0 0.0
      %555 = vmatprep.subr.mxu0 0.0
      %556 = vmatpush1.xpose.msra.mxu0 0.0
      %557 = vmatprep.subr.mxu0 0.0
      %558 = vmatpush1.xpose.msra.mxu0 0.0
      %559 = vmatprep.subr.mxu0 0.0
      %560 = vmatpush1.xpose.msra.mxu0 0.0
      %561 = vmatprep.subr.mxu0 0.0
      %562 = vmatpush1.xpose.msra.mxu0 0.0
      %563 = vmatprep.subr.mxu0 0.0
      %564 = vmatpush1.xpose.msra.mxu0 0.0
      %565 = vmatprep.subr.mxu0 0.0
      %566 = vmatpush1.xpose.msra.mxu0 0.0
      %567 = vmatprep.subr.mxu0 0.0
      %568 = vmatpush1.xpose.msra.mxu0 0.0
      %569 = vmatprep.subr.mxu0 0.0
      %570 = vmatpush1.xpose.msra.mxu0 0.0
      %571 = vmatprep.subr.mxu0 0.0
      %572 = vmatpush1.xpose.msra.mxu0 0.0
      %573 = vmatprep.subr.mxu0 0.0
      %574 = vmatpush1.xpose.msra.mxu0 0.0
      %575 = vmatprep.subr.mxu0 0.0
      %576 = vmatpush1.xpose.msra.mxu0 0.0
      %577 = vmatprep.subr.mxu0 0.0
      %578 = vmatpush1.xpose.msra.mxu0 0.0
      %579 = vmatprep.subr.mxu0 0.0
      %580 = vmatpush1.xpose.msra.mxu0 0.0
      %581 = vmatprep.subr.mxu0 0.0
      %582 = vmatpush1.xpose.msra.mxu0 0.0
      %583 = vmatprep.subr.mxu0 0.0
      %584 = vmatpush1.xpose.msra.mxu0 0.0
      %585 = vmatprep.subr.mxu0 0.0
      %586 = vmatpush1.xpose.msra.mxu0 0.0
      %587 = vmatprep.subr.mxu0 0.0
      %588 = vmatpush1.xpose.msra.mxu0 0.0
      %589 = vmatprep.subr.mxu0 0.0
      %590 = vmatpush1.xpose.msra.mxu0 0.0
      %591 = vmatprep.subr.mxu0 0.0
      %592 = vmatpush1.xpose.msra.mxu0 0.0
      %593 = vmatprep.subr.mxu0 0.0
      %594 = vmatpush1.xpose.msra.mxu0 0.0
      %595 = vmatprep.subr.mxu0 0.0
      %596 = vmatpush1.xpose.msra.mxu0 0.0
      %597 = vmatprep.mubr.f32.mxu0 0.0
      %598 = vmatmul.mubr.f32.gmra.mrb[0].mxu0 %v529
      %v599 = vpop.f32.mrb[0].mxu0
      %v600 = vadd.f32 %v339, %v599
      %v601 = vpop.f32.mrb[0].mxu0
      %602 = vdwg.mxu0
      %s603 = scalar_lea.vmem [#allocation2], 8
      %v604 = vld [vmem:[%s603] sm:$0xff]
      %v605 = vsel %vm341, %v600, -inf
      %606 = vmax.xlane.f32.xlu0 %v605
      %v607 = vpop.xlane.xlu0 %606
      %v608 = vmax.f32 %v604, %v607
      %v609 = vsub.f32 %v604, %v608
      %v610 = vmul.f32 %v609, 1.442695
      %v611 = vpow.pop %v610
      %613 = vset.pattern.permute.xlu0 0
      %614 = vperm.xlu0 %613, %v608
      %v615 = vpop.permute.xlu0 %614
      %v617 = vsub.f32 %v600, %v615
      %v618 = vmul.f32 %v617, 1.442695
      %v619 = vpow.pop %v618
      %s620 = scalar_lea.vmem [#allocation3], 8
      %v621 = vld [vmem:[%s620] sm:$0xff]
      %v622 = vmul.f32 %v611, %v621
      %v623 = vsel %vm341, %v619, 0.0
      %624 = vadd.xlane.f32.xlu0 %v623
      %v625 = vpop.xlane.xlu0 %624
      %v626 = vadd.f32 %v622, %v625
      %627 = vst.msk [vmem:[%s620] sm:$0xff] %vm440, %v626
      %s628 = scalar_lea.vmem [#allocation4], 8
      %v629 = vld [vmem:[%s628] sm:$0xff]
      %631 = vset.pattern.permute.xlu0 0
      %632 = vperm.xlu0 %631, %v611
      %v633 = vpop.permute.xlu0 %632
      %v635 = vmul.f32 %v633, %v629
      %637 = vrot.lane.b32.xlu0 %v333, 120
      %v638 = vpop.permute.xlu0 %637
      %v641 = vsel %vm341, %v619, 0
      %643 = vmatprep.subr.mxu0 0.0
      %644 = vmatpush1.msra.mxu0 %v638
      %645 = vmatprep.subr.mxu0 0.0
      %646 = vmatpush1.msra.mxu0 0.0
      %647 = vmatprep.subr.mxu0 0.0
      %648 = vmatpush1.msra.mxu0 0.0
      %649 = vmatprep.subr.mxu0 0.0
      %650 = vmatpush1.msra.mxu0 0.0
      %651 = vmatprep.subr.mxu0 0.0
      %652 = vmatpush1.msra.mxu0 0.0
      %653 = vmatprep.subr.mxu0 0.0
      %654 = vmatpush1.msra.mxu0 0.0
      %655 = vmatprep.subr.mxu0 0.0
      %656 = vmatpush1.msra.mxu0 0.0
      %657 = vmatprep.subr.mxu0 0.0
      %658 = vmatpush1.msra.mxu0 0.0
      %659 = vmatprep.subr.mxu0 0.0
      %660 = vmatpush1.msra.mxu0 0.0
      %661 = vmatprep.subr.mxu0 0.0
      %662 = vmatpush1.msra.mxu0 0.0
      %663 = vmatprep.subr.mxu0 0.0
      %664 = vmatpush1.msra.mxu0 0.0
      %665 = vmatprep.subr.mxu0 0.0
      %666 = vmatpush1.msra.mxu0 0.0
      %667 = vmatprep.subr.mxu0 0.0
      %668 = vmatpush1.msra.mxu0 0.0
      %669 = vmatprep.subr.mxu0 0.0
      %670 = vmatpush1.msra.mxu0 0.0
      %671 = vmatprep.subr.mxu0 0.0
      %672 = vmatpush1.msra.mxu0 0.0
      %673 = vmatprep.subr.mxu0 0.0
      %674 = vmatpush1.msra.mxu0 0.0
      %675 = vmatprep.subr.mxu0 0.0
      %676 = vmatpush1.msra.mxu0 0.0
      %677 = vmatprep.subr.mxu0 0.0
      %678 = vmatpush1.msra.mxu0 0.0
      %679 = vmatprep.subr.mxu0 0.0
      %680 = vmatpush1.msra.mxu0 0.0
      %681 = vmatprep.subr.mxu0 0.0
      %682 = vmatpush1.msra.mxu0 0.0
      %683 = vmatprep.subr.mxu0 0.0
      %684 = vmatpush1.msra.mxu0 0.0
      %685 = vmatprep.subr.mxu0 0.0
      %686 = vmatpush1.msra.mxu0 0.0
      %687 = vmatprep.subr.mxu0 0.0
      %688 = vmatpush1.msra.mxu0 0.0
      %689 = vmatprep.subr.mxu0 0.0
      %690 = vmatpush1.msra.mxu0 0.0
      %691 = vmatprep.subr.mxu0 0.0
      %692 = vmatpush1.msra.mxu0 0.0
      %693 = vmatprep.subr.mxu0 0.0
      %694 = vmatpush1.msra.mxu0 0.0
      %695 = vmatprep.subr.mxu0 0.0
      %696 = vmatpush1.msra.mxu0 0.0
      %697 = vmatprep.subr.mxu0 0.0
      %698 = vmatpush1.msra.mxu0 0.0
      %699 = vmatprep.subr.mxu0 0.0
      %700 = vmatpush1.msra.mxu0 0.0
      %701 = vmatprep.subr.mxu0 0.0
      %702 = vmatpush1.msra.mxu0 0.0
      %703 = vmatprep.subr.mxu0 0.0
      %704 = vmatpush1.msra.mxu0 0.0
      %705 = vmatprep.subr.mxu0 0.0
      %706 = vmatpush1.msra.mxu0 0.0
      %707 = vmatprep.mubr.f32.mxu0 0.0
      %708 = vmatmul.mubr.f32.gmra.mrb[0].mxu0 %v641
      %v709 = vpop.f32.mrb[0].mxu0
      %v710 = vadd.f32 0.0, %v709
      %v711 = vpop.f32.mrb[0].mxu0
      %712 = vdwg.mxu0
      %v713 = vadd.f32 %v635, %v710
      %714 = vst.msk [vmem:[%s628] sm:$0xff] %vm341, %v713
      %715 = vst.msk [vmem:[%s603] sm:$0xff] %vm440, %v608
      %716 = vrot.lane.b32.xlu0 %v331, 112
      %v717 = vpop.permute.xlu0 %716
      %718 = vrot.lane.b32.xlu0 %v332, 112
      %v719 = vpop.permute.xlu0 %718
      %v720 = vsel %vm341, %v717, 0
      %v722 = vsel %vm341, %v719, 0
      %724 = vmatprep.subr.mxu0 0.0
      %725 = vmatpush1.xpose.msra.mxu0 %v722
      %726 = vmatprep.subr.mxu0 0.0
      %727 = vmatpush1.xpose.msra.mxu0 0.0
      %728 = vmatprep.subr.mxu0 0.0
      %729 = vmatpush1.xpose.msra.mxu0 0.0
      %730 = vmatprep.subr.mxu0 0.0
      %731 = vmatpush1.xpose.msra.mxu0 0.0
      %732 = vmatprep.subr.mxu0 0.0
      %733 = vmatpush1.xpose.msra.mxu0 0.0
      %734 = vmatprep.subr.mxu0 0.0
      %735 = vmatpush1.xpose.msra.mxu0 0.0
      %736 = vmatprep.subr.mxu0 0.0
      %737 = vmatpush1.xpose.msra.mxu0 0.0
      %738 = vmatprep.subr.mxu0 0.0
      %739 = vmatpush1.xpose.msra.mxu0 0.0
      %740 = vmatprep.subr.mxu0 0.0
      %741 = vmatpush1.xpose.msra.mxu0 0.0
      %742 = vmatprep.subr.mxu0 0.0
      %743 = vmatpush1.xpose.msra.mxu0 0.0
      %744 = vmatprep.subr.mxu0 0.0
      %745 = vmatpush1.xpose.msra.mxu0 0.0
      %746 = vmatprep.subr.mxu0 0.0
      %747 = vmatpush1.xpose.msra.mxu0 0.0
      %748 = vmatprep.subr.mxu0 0.0
      %749 = vmatpush1.xpose.msra.mxu0 0.0
      %750 = vmatprep.subr.mxu0 0.0
      %751 = vmatpush1.xpose.msra.mxu0 0.0
      %752 = vmatprep.subr.mxu0 0.0
      %753 = vmatpush1.xpose.msra.mxu0 0.0
      %754 = vmatprep.subr.mxu0 0.0
      %755 = vmatpush1.xpose.msra.mxu0 0.0
      %756 = vmatprep.subr.mxu0 0.0
      %757 = vmatpush1.xpose.msra.mxu0 0.0
      %758 = vmatprep.subr.mxu0 0.0
      %759 = vmatpush1.xpose.msra.mxu0 0.0
      %760 = vmatprep.subr.mxu0 0.0
      %761 = vmatpush1.xpose.msra.mxu0 0.0
      %762 = vmatprep.subr.mxu0 0.0
      %763 = vmatpush1.xpose.msra.mxu0 0.0
      %764 = vmatprep.subr.mxu0 0.0
      %765 = vmatpush1.xpose.msra.mxu0 0.0
      %766 = vmatprep.subr.mxu0 0.0
      %767 = vmatpush1.xpose.msra.mxu0 0.0
      %768 = vmatprep.subr.mxu0 0.0
      %769 = vmatpush1.xpose.msra.mxu0 0.0
      %770 = vmatprep.subr.mxu0 0.0
      %771 = vmatpush1.xpose.msra.mxu0 0.0
      %772 = vmatprep.subr.mxu0 0.0
      %773 = vmatpush1.xpose.msra.mxu0 0.0
      %774 = vmatprep.subr.mxu0 0.0
      %775 = vmatpush1.xpose.msra.mxu0 0.0
      %776 = vmatprep.subr.mxu0 0.0
      %777 = vmatpush1.xpose.msra.mxu0 0.0
      %778 = vmatprep.subr.mxu0 0.0
      %779 = vmatpush1.xpose.msra.mxu0 0.0
      %780 = vmatprep.subr.mxu0 0.0
      %781 = vmatpush1.xpose.msra.mxu0 0.0
      %782 = vmatprep.subr.mxu0 0.0
      %783 = vmatpush1.xpose.msra.mxu0 0.0
      %784 = vmatprep.subr.mxu0 0.0
      %785 = vmatpush1.xpose.msra.mxu0 0.0
      %786 = vmatprep.subr.mxu0 0.0
      %787 = vmatpush1.xpose.msra.mxu0 0.0
      %788 = vmatprep.mubr.f32.mxu0 0.0
      %789 = vmatmul.mubr.f32.gmra.mrb[0].mxu0 %v720
      %v790 = vpop.f32.mrb[0].mxu0
      %v791 = vadd.f32 %v339, %v790
      %v792 = vpop.f32.mrb[0].mxu0
      %793 = vdwg.mxu0
      %s794 = scalar_lea.vmem [#allocation2], 16
      %v795 = vld [vmem:[%s794] sm:$0xff]
      %v796 = vsel %vm341, %v791, -inf
      %797 = vmax.xlane.f32.xlu0 %v796
      %v798 = vpop.xlane.xlu0 %797
      %v799 = vmax.f32 %v795, %v798
      %v800 = vsub.f32 %v795, %v799
      %v801 = vmul.f32 %v800, 1.442695
      %v802 = vpow.pop %v801
      %804 = vset.pattern.permute.xlu0 0
      %805 = vperm.xlu0 %804, %v799
      %v806 = vpop.permute.xlu0 %805
      %v808 = vsub.f32 %v791, %v806
      %v809 = vmul.f32 %v808, 1.442695
      %v810 = vpow.pop %v809
      %s811 = scalar_lea.vmem [#allocation3], 16
      %v812 = vld [vmem:[%s811] sm:$0xff]
      %v813 = vmul.f32 %v802, %v812
      %v814 = vsel %vm341, %v810, 0.0
      %815 = vadd.xlane.f32.xlu0 %v814
      %v816 = vpop.xlane.xlu0 %815
      %v817 = vadd.f32 %v813, %v816
      %818 = vst.msk [vmem:[%s811] sm:$0xff] %vm440, %v817
      %s819 = scalar_lea.vmem [#allocation4], 16
      %v820 = vld [vmem:[%s819] sm:$0xff]
      %822 = vset.pattern.permute.xlu0 0
      %823 = vperm.xlu0 %822, %v802
      %v824 = vpop.permute.xlu0 %823
      %v826 = vmul.f32 %v824, %v820
      %827 = vrot.lane.b32.xlu0 %v333, 112
      %v828 = vpop.permute.xlu0 %827
      %v831 = vsel %vm341, %v810, 0
      %833 = vmatprep.subr.mxu0 0.0
      %834 = vmatpush1.msra.mxu0 %v828
      %835 = vmatprep.subr.mxu0 0.0
      %836 = vmatpush1.msra.mxu0 0.0
      %837 = vmatprep.subr.mxu0 0.0
      %838 = vmatpush1.msra.mxu0 0.0
      %839 = vmatprep.subr.mxu0 0.0
      %840 = vmatpush1.msra.mxu0 0.0
      %841 = vmatprep.subr.mxu0 0.0
      %842 = vmatpush1.msra.mxu0 0.0
      %843 = vmatprep.subr.mxu0 0.0
      %844 = vmatpush1.msra.mxu0 0.0
      %845 = vmatprep.subr.mxu0 0.0
      %846 = vmatpush1.msra.mxu0 0.0
      %847 = vmatprep.subr.mxu0 0.0
      %848 = vmatpush1.msra.mxu0 0.0
      %849 = vmatprep.subr.mxu0 0.0
      %850 = vmatpush1.msra.mxu0 0.0
      %851 = vmatprep.subr.mxu0 0.0
      %852 = vmatpush1.msra.mxu0 0.0
      %853 = vmatprep.subr.mxu0 0.0
      %854 = vmatpush1.msra.mxu0 0.0
      %855 = vmatprep.subr.mxu0 0.0
      %856 = vmatpush1.msra.mxu0 0.0
      %857 = vmatprep.subr.mxu0 0.0
      %858 = vmatpush1.msra.mxu0 0.0
      %859 = vmatprep.subr.mxu0 0.0
      %860 = vmatpush1.msra.mxu0 0.0
      %861 = vmatprep.subr.mxu0 0.0
      %862 = vmatpush1.msra.mxu0 0.0
      %863 = vmatprep.subr.mxu0 0.0
      %864 = vmatpush1.msra.mxu0 0.0
      %865 = vmatprep.subr.mxu0 0.0
      %866 = vmatpush1.msra.mxu0 0.0
      %867 = vmatprep.subr.mxu0 0.0
      %868 = vmatpush1.msra.mxu0 0.0
      %869 = vmatprep.subr.mxu0 0.0
      %870 = vmatpush1.msra.mxu0 0.0
      %871 = vmatprep.subr.mxu0 0.0
      %872 = vmatpush1.msra.mxu0 0.0
      %873 = vmatprep.subr.mxu0 0.0
      %874 = vmatpush1.msra.mxu0 0.0
      %875 = vmatprep.subr.mxu0 0.0
      %876 = vmatpush1.msra.mxu0 0.0
      %877 = vmatprep.subr.mxu0 0.0
      %878 = vmatpush1.msra.mxu0 0.0
      %879 = vmatprep.subr.mxu0 0.0
      %880 = vmatpush1.msra.mxu0 0.0
      %881 = vmatprep.subr.mxu0 0.0
      %882 = vmatpush1.msra.mxu0 0.0
      %883 = vmatprep.subr.mxu0 0.0
      %884 = vmatpush1.msra.mxu0 0.0
      %885 = vmatprep.subr.mxu0 0.0
      %886 = vmatpush1.msra.mxu0 0.0
      %887 = vmatprep.subr.mxu0 0.0
      %888 = vmatpush1.msra.mxu0 0.0
      %889 = vmatprep.subr.mxu0 0.0
      %890 = vmatpush1.msra.mxu0 0.0
      %891 = vmatprep.subr.mxu0 0.0
      %892 = vmatpush1.msra.mxu0 0.0
      %893 = vmatprep.subr.mxu0 0.0
      %894 = vmatpush1.msra.mxu0 0.0
      %895 = vmatprep.subr.mxu0 0.0
      %896 = vmatpush1.msra.mxu0 0.0
      %897 = vmatprep.mubr.f32.mxu0 0.0
      %898 = vmatmul.mubr.f32.gmra.mrb[0].mxu0 %v831
      %v899 = vpop.f32.mrb[0].mxu0
      %v900 = vadd.f32 0.0, %v899
      %v901 = vpop.f32.mrb[0].mxu0
      %902 = vdwg.mxu0
      %v903 = vadd.f32 %v826, %v900
      %904 = vst.msk [vmem:[%s819] sm:$0xff] %vm341, %v903
      %905 = vst.msk [vmem:[%s794] sm:$0xff] %vm440, %v799
      %906 = vrot.lane.b32.xlu0 %v331, 104
      %v907 = vpop.permute.xlu0 %906
      %908 = vrot.lane.b32.xlu0 %v332, 104
      %v909 = vpop.permute.xlu0 %908
      %v910 = vsel %vm341, %v907, 0
      %v912 = vsel %vm341, %v909, 0
      %914 = vmatprep.subr.mxu0 0.0
      %915 = vmatpush1.xpose.msra.mxu0 %v912
      %916 = vmatprep.subr.mxu0 0.0
      %917 = vmatpush1.xpose.msra.mxu0 0.0
      %918 = vmatprep.subr.mxu0 0.0
      %919 = vmatpush1.xpose.msra.mxu0 0.0
      %920 = vmatprep.subr.mxu0 0.0
      %921 = vmatpush1.xpose.msra.mxu0 0.0
      %922 = vmatprep.subr.mxu0 0.0
      %923 = vmatpush1.xpose.msra.mxu0 0.0
      %924 = vmatprep.subr.mxu0 0.0
      %925 = vmatpush1.xpose.msra.mxu0 0.0
      %926 = vmatprep.subr.mxu0 0.0
      %927 = vmatpush1.xpose.msra.mxu0 0.0
      %928 = vmatprep.subr.mxu0 0.0
      %929 = vmatpush1.xpose.msra.mxu0 0.0
      %930 = vmatprep.subr.mxu0 0.0
      %931 = vmatpush1.xpose.msra.mxu0 0.0
      %932 = vmatprep.subr.mxu0 0.0
      %933 = vmatpush1.xpose.msra.mxu0 0.0
      %934 = vmatprep.subr.mxu0 0.0
      %935 = vmatpush1.xpose.msra.mxu0 0.0
      %936 = vmatprep.subr.mxu0 0.0
      %937 = vmatpush1.xpose.msra.mxu0 0.0
      %938 = vmatprep.subr.mxu0 0.0
      %939 = vmatpush1.xpose.msra.mxu0 0.0
      %940 = vmatprep.subr.mxu0 0.0
      %941 = vmatpush1.xpose.msra.mxu0 0.0
      %942 = vmatprep.subr.mxu0 0.0
      %943 = vmatpush1.xpose.msra.mxu0 0.0
      %944 = vmatprep.subr.mxu0 0.0
      %945 = vmatpush1.xpose.msra.mxu0 0.0
      %946 = vmatprep.subr.mxu0 0.0
      %947 = vmatpush1.xpose.msra.mxu0 0.0
      %948 = vmatprep.subr.mxu0 0.0
      %949 = vmatpush1.xpose.msra.mxu0 0.0
      %950 = vmatprep.subr.mxu0 0.0
      %951 = vmatpush1.xpose.msra.mxu0 0.0
      %952 = vmatprep.subr.mxu0 0.0
      %953 = vmatpush1.xpose.msra.mxu0 0.0
      %954 = vmatprep.subr.mxu0 0.0
      %955 = vmatpush1.xpose.msra.mxu0 0.0
      %956 = vmatprep.subr.mxu0 0.0
      %957 = vmatpush1.xpose.msra.mxu0 0.0
      %958 = vmatprep.subr.mxu0 0.0
      %959 = vmatpush1.xpose.msra.mxu0 0.0
      %960 = vmatprep.subr.mxu0 0.0
      %961 = vmatpush1.xpose.msra.mxu0 0.0
      %962 = vmatprep.subr.mxu0 0.0
      %963 = vmatpush1.xpose.msra.mxu0 0.0
      %964 = vmatprep.subr.mxu0 0.0
      %965 = vmatpush1.xpose.msra.mxu0 0.0
      %966 = vmatprep.subr.mxu0 0.0
      %967 = vmatpush1.xpose.msra.mxu0 0.0
      %968 = vmatprep.subr.mxu0 0.0
      %969 = vmatpush1.xpose.msra.mxu0 0.0
      %970 = vmatprep.subr.mxu0 0.0
      %971 = vmatpush1.xpose.msra.mxu0 0.0
      %972 = vmatprep.subr.mxu0 0.0
      %973 = vmatpush1.xpose.msra.mxu0 0.0
      %974 = vmatprep.subr.mxu0 0.0
      %975 = vmatpush1.xpose.msra.mxu0 0.0
      %976 = vmatprep.subr.mxu0 0.0
      %977 = vmatpush1.xpose.msra.mxu0 0.0
      %978 = vmatprep.mubr.f32.mxu0 0.0
      %979 = vmatmul.mubr.f32.gmra.mrb[0].mxu0 %v910
      %v980 = vpop.f32.mrb[0].mxu0
      %v981 = vadd.f32 %v339, %v980
      %v982 = vpop.f32.mrb[0].mxu0
      %983 = vdwg.mxu0
      %s984 = scalar_lea.vmem [#allocation2], 24
      %v985 = vld [vmem:[%s984] sm:$0xff]
      %v986 = vsel %vm341, %v981, -inf
      %987 = vmax.xlane.f32.xlu0 %v986
      %v988 = vpop.xlane.xlu0 %987
      %v989 = vmax.f32 %v985, %v988
      %v990 = vsub.f32 %v985, %v989
      %v991 = vmul.f32 %v990, 1.442695
      %v992 = vpow.pop %v991
      %994 = vset.pattern.permute.xlu0 0
      %995 = vperm.xlu0 %994, %v989
      %v996 = vpop.permute.xlu0 %995
      %v998 = vsub.f32 %v981, %v996
      %v999 = vmul.f32 %v998, 1.442695
      %v1000 = vpow.pop %v999
      %s1001 = scalar_lea.vmem [#allocation3], 24
      %v1002 = vld [vmem:[%s1001] sm:$0xff]
      %v1003 = vmul.f32 %v992, %v1002
      %v1004 = vsel %vm341, %v1000, 0.0
      %1005 = vadd.xlane.f32.xlu0 %v1004
      %v1006 = vpop.xlane.xlu0 %1005
      %v1007 = vadd.f32 %v1003, %v1006
      %1008 = vst.msk [vmem:[%s1001] sm:$0xff] %vm440, %v1007
      %s1009 = scalar_lea.vmem [#allocation4], 24
      %v1010 = vld [vmem:[%s1009] sm:$0xff]
      %1012 = vset.pattern.permute.xlu0 0
      %1013 = vperm.xlu0 %1012, %v992
      %v1014 = vpop.permute.xlu0 %1013
      %v1016 = vmul.f32 %v1014, %v1010
      %1017 = vrot.lane.b32.xlu0 %v333, 104
      %v1018 = vpop.permute.xlu0 %1017
      %v1021 = vsel %vm341, %v1000, 0
      %1023 = vmatprep.subr.mxu0 0.0
      %1024 = vmatpush1.msra.mxu0 %v1018
      %1025 = vmatprep.subr.mxu0 0.0
      %1026 = vmatpush1.msra.mxu0 0.0
      %1027 = vmatprep.subr.mxu0 0.0
      %1028 = vmatpush1.msra.mxu0 0.0
      %1029 = vmatprep.subr.mxu0 0.0
      %1030 = vmatpush1.msra.mxu0 0.0
      %1031 = vmatprep.subr.mxu0 0.0
      %1032 = vmatpush1.msra.mxu0 0.0
      %1033 = vmatprep.subr.mxu0 0.0
      %1034 = vmatpush1.msra.mxu0 0.0
      %1035 = vmatprep.subr.mxu0 0.0
      %1036 = vmatpush1.msra.mxu0 0.0
      %1037 = vmatprep.subr.mxu0 0.0
      %1038 = vmatpush1.msra.mxu0 0.0
      %1039 = vmatprep.subr.mxu0 0.0
      %1040 = vmatpush1.msra.mxu0 0.0
      %1041 = vmatprep.subr.mxu0 0.0
      %1042 = vmatpush1.msra.mxu0 0.0
      %1043 = vmatprep.subr.mxu0 0.0
      %1044 = vmatpush1.msra.mxu0 0.0
      %1045 = vmatprep.subr.mxu0 0.0
      %1046 = vmatpush1.msra.mxu0 0.0
      %1047 = vmatprep.subr.mxu0 0.0
      %1048 = vmatpush1.msra.mxu0 0.0
      %1049 = vmatprep.subr.mxu0 0.0
      %1050 = vmatpush1.msra.mxu0 0.0
      %1051 = vmatprep.subr.mxu0 0.0
      %1052 = vmatpush1.msra.mxu0 0.0
      %1053 = vmatprep.subr.mxu0 0.0
      %1054 = vmatpush1.msra.mxu0 0.0
      %1055 = vmatprep.subr.mxu0 0.0
      %1056 = vmatpush1.msra.mxu0 0.0
      %1057 = vmatprep.subr.mxu0 0.0
      %1058 = vmatpush1.msra.mxu0 0.0
      %1059 = vmatprep.subr.mxu0 0.0
      %1060 = vmatpush1.msra.mxu0 0.0
      %1061 = vmatprep.subr.mxu0 0.0
      %1062 = vmatpush1.msra.mxu0 0.0
      %1063 = vmatprep.subr.mxu0 0.0
      %1064 = vmatpush1.msra.mxu0 0.0
      %1065 = vmatprep.subr.mxu0 0.0
      %1066 = vmatpush1.msra.mxu0 0.0
      %1067 = vmatprep.subr.mxu0 0.0
      %1068 = vmatpush1.msra.mxu0 0.0
      %1069 = vmatprep.subr.mxu0 0.0
      %1070 = vmatpush1.msra.mxu0 0.0
      %1071 = vmatprep.subr.mxu0 0.0
      %1072 = vmatpush1.msra.mxu0 0.0
      %1073 = vmatprep.subr.mxu0 0.0
      %1074 = vmatpush1.msra.mxu0 0.0
      %1075 = vmatprep.subr.mxu0 0.0
      %1076 = vmatpush1.msra.mxu0 0.0
      %1077 = vmatprep.subr.mxu0 0.0
      %1078 = vmatpush1.msra.mxu0 0.0
      %1079 = vmatprep.subr.mxu0 0.0
      %1080 = vmatpush1.msra.mxu0 0.0
      %1081 = vmatprep.subr.mxu0 0.0
      %1082 = vmatpush1.msra.mxu0 0.0
      %1083 = vmatprep.subr.mxu0 0.0
      %1084 = vmatpush1.msra.mxu0 0.0
      %1085 = vmatprep.subr.mxu0 0.0
      %1086 = vmatpush1.msra.mxu0 0.0
      %1087 = vmatprep.mubr.f32.mxu0 0.0
      %1088 = vmatmul.mubr.f32.gmra.mrb[0].mxu0 %v1021
      %v1089 = vpop.f32.mrb[0].mxu0
      %v1090 = vadd.f32 0.0, %v1089
      %v1091 = vpop.f32.mrb[0].mxu0
      %1092 = vdwg.mxu0
      %v1093 = vadd.f32 %v1016, %v1090
      %1094 = vst.msk [vmem:[%s1009] sm:$0xff] %vm341, %v1093
      %1095 = vst.msk [vmem:[%s984] sm:$0xff] %vm440, %v989
      // Predicated region
      $region41: #{deepspeed_self_attention_forward.4} parent=35 // pred_check
        %p1096 = pneg %p312
      $region42: #{deepspeed_self_attention_forward.4} parent=35 // pred_check_branch
        %1098 = sbr.rel (%p1096) target = $region44
      $region43: #{deepspeed_self_attention_forward.4} parent=35 // pred_region
        %v1099 = vld [vmem:[#allocation4] sm:$0xff]
        %v1100 = vld [vmem:[#allocation3] sm:$0xff]
        %v1101 = vrcp.pop %v1100
        %1103 = vset.pattern.permute.xlu0 0
        %1104 = vperm.xlu0 %1103, %v1101
        %v1105 = vpop.permute.xlu0 %1104
        %v1107 = vmul.f32 %v1099, %v1105
        %v1108 = vld [vmem:[%s628] sm:$0xff]
        %v1109 = vld [vmem:[%s620] sm:$0xff]
        %v1110 = vrcp.pop %v1109
        %1112 = vset.pattern.permute.xlu0 0
        %1113 = vperm.xlu0 %1112, %v1110
        %v1114 = vpop.permute.xlu0 %1113
        %v1116 = vmul.f32 %v1108, %v1114
        %v1117 = vld [vmem:[%s819] sm:$0xff]
        %v1118 = vld [vmem:[%s811] sm:$0xff]
        %v1119 = vrcp.pop %v1118
        %1121 = vset.pattern.permute.xlu0 0
        %1122 = vperm.xlu0 %1121, %v1119
        %v1123 = vpop.permute.xlu0 %1122
        %v1125 = vmul.f32 %v1117, %v1123
        %v1126 = vld [vmem:[%s1009] sm:$0xff]
        %v1127 = vld [vmem:[%s1001] sm:$0xff]
        %v1128 = vrcp.pop %v1127
        %1130 = vset.pattern.permute.xlu0 0
        %1131 = vperm.xlu0 %1130, %v1128
        %v1132 = vpop.permute.xlu0 %1131
        %v1134 = vmul.f32 %v1126, %v1132
        %1136 = vrot.lane.b32.xlu0 %v1116, 8
        %v1137 = vpop.permute.xlu0 %1136
        %1140 = vrot.lane.b32.xlu0 %v1125, 16
        %v1141 = vpop.permute.xlu0 %1140
        %1144 = vrot.lane.b32.xlu0 %v1134, 24
        %v1145 = vpop.permute.xlu0 %1144
        %v1147 = vsel %vm341, %v1107, %v1137
        %vm1148 = vcmask 130048
        %v1149 = vsel %vm1148, %v1147, %v1141
        %vm1150 = vcmask 195584
        %v1151 = vsel %vm1150, %v1149, %v1145
        %vm1152 = vcmask 261120
        %1153 = vst.msk [vmem:[%s311] sm:$0xff] %vm1152, %v1151
      $region44: #{deepspeed_self_attention_forward.4} parent=35 // pred_fallthru
        _
      %p1154 = scmp.lt.s32.totalorder %s20, 1
      %s1155 = scalar_select %p1154, %s20, 1
      %p1156 = scmp.lt.s32.totalorder %s21, 0
      %s1157 = scalar_select %p1156, %s21, 0
      %s1158 = sadd.s32 %s1157, %s1155
      %s1159 = smul.addr %s1158, 8
      %s1160 = scalar_lea.vmem %s4, %s1159
      // Predicated region
      $region45: #{deepspeed_self_attention_forward.4} parent=35 // pred_check
        %p1161 = pneg %p166
      $region46: #{deepspeed_self_attention_forward.4} parent=35 // pred_check_branch
        %1163 = sbr.rel (%p1161) target = $region48
      $region47: #{deepspeed_self_attention_forward.4} parent=35 // pred_region
        _
      $region48: #{deepspeed_self_attention_forward.4} parent=35 // pred_fallthru
        _
    $region36: #{deepspeed_self_attention_forward.4} parent=5 // pred_fallthru
      _
    %p1164 = scmp.le.s32.totalorder 2, %s10
    // Predicated region
    $region49: #{deepspeed_self_attention_forward.4} parent=5 // pred_check
      %p1165 = pneg %p1164
    $region50: #{deepspeed_self_attention_forward.4} parent=5 // pred_check_branch
      %1167 = sbr.rel (%p1165) target = $region52
    $region51: #{deepspeed_self_attention_forward.4} parent=5 // pred_region
      %s1168 = ssub.s32 %s10, 2
      // Predicated region
      $region53: #{deepspeed_self_attention_forward.4} parent=51 // pred_check
        %p1169 = pneg %p172
      $region54: #{deepspeed_self_attention_forward.4} parent=51 // pred_check_branch
        %1171 = sbr.rel (%p1169) target = $region56
      $region55: #{deepspeed_self_attention_forward.4} parent=51 // pred_region
        %p1172 = scmp.lt.s32.totalorder %s23, 1
        %s1173 = scalar_select %p1172, %s23, 1
        %p1174 = scmp.lt.s32.totalorder %s24, 0
        %s1175 = scalar_select %p1174, %s24, 0
        %s1176 = sadd.s32 %s1175, %s1173
        %s1177 = smul.addr %s1176, 8
        %s1178 = scalar_lea.vmem %s4, %s1177
      $region56: #{deepspeed_self_attention_forward.4} parent=51 // pred_fallthru
        _
    $region52: #{deepspeed_self_attention_forward.4} parent=5 // pred_fallthru
      _
  $region6: #{deepspeed_self_attention_forward.4} parent=0 // loop_footer
    %s14 = sadd.s32 1, %s10
  $region7: #{deepspeed_self_attention_forward.4} parent=0 // loop_footer_branch
    %9 = sbr.rel target = $region3
  $region8: #{deepspeed_self_attention_forward.4} parent=0 // loop_exit
    _

</llo_original>
